<compile_context>
chip_gen: v5e
topology: v5e:2x2
jax: 0.10.0
libtpu: 0.0.40
codegen_flags: <defaults>
</compile_context>

<pallas_src>
import jax
import jax.numpy as jnp
from jax import lax
from jax.experimental import pallas as pl
from jax.experimental.pallas import tpu as pltpu

_OUT_LANES = 128
_NEG_BIG = -1e30       # finite "-inf" for padded class logits (avoids 0*inf NaN)
_DENOM_FLOOR = 1e-30   # guards log() if the target is excluded and underflows


def _round_up(n, m):
    return ((n + m - 1) // m) * m


def _tpu_kind():
    try:
        return jax.devices()[0].device_kind.lower()
    except Exception:
        return ""


def _generation_config():
    """(class-pad lane multiple, scoped-VMEM budget in bytes) per TPU generation."""
    kind = _tpu_kind()
    if "v7" in kind:                      # 64 MiB physical VMEM per TensorCore
        return 256, 44 * 1024 * 1024
    if "v6" in kind:                      # 128 MiB physical, 256x256 MXU
        return 256, 64 * 1024 * 1024
    return 128, 64 * 1024 * 1024          # v5e / unknown: 128x128 MXU, conservative


# --------------------------------------------------------------------------- #
# Kernel
# --------------------------------------------------------------------------- #
def _snapmix_eql_kernel(x_ref, wT_ref, b_ref, wbt_ref, side_ref, out_ref):
    # Linear layer: cast x to bf16 in-kernel, MXU matmul with f32 accumulate.
    x = x_ref[...].astype(jnp.bfloat16)
    logits = jnp.dot(x, wT_ref[...],
                     preferred_element_type=jnp.float32) + b_ref[...]
    Bt, Cp = logits.shape

    # Numerically-stable EQL softmax, target-only log-sum-exp form.
    m = jnp.max(logits, axis=1, keepdims=True)                 # (Bt,1)
    e = jnp.exp(logits - m)                                    # (Bt,Cp), <= 1
    wbt = wbt_ref[...]                                         # (1,Cp) beta*thre
    s0 = jnp.sum((1.0 - wbt) * e, axis=1, keepdims=True)       # shared denom part

    side = side_ref[...]                                       # (Bt,3) int32
    ya = side[:, 0:1]
    yb = side[:, 1:2]
    valid = side[:, 2:3] > 0                                   # pad/garbage rows -> 0

    # select-reduce gathers: no (Bt,Cp) one-hot / int iota / wbt*e temporaries
    lane = lax.broadcasted_iota(jnp.int32, (1, Cp), 1)
    hit_a = lane == ya
    hit_b = lane == yb
    ta = jnp.sum(jnp.where(hit_a, logits, 0.0), axis=1, keepdims=True) - m
    tb = jnp.sum(jnp.where(hit_b, logits, 0.0), axis=1, keepdims=True) - m
    wbt_a = jnp.sum(jnp.where(hit_a, wbt, 0.0), axis=1, keepdims=True)
    wbt_b = jnp.sum(jnp.where(hit_b, wbt, 0.0), axis=1, keepdims=True)

    # denominator = sum((1-wbt)*e) + wbt[y]*e[y]  ==  sum(eqw*e) of the spec
    sa = jnp.maximum(s0 + wbt_a * jnp.exp(ta), _DENOM_FLOOR)
    sb = jnp.maximum(s0 + wbt_b * jnp.exp(tb), _DENOM_FLOOR)
    lp_a = ta - jnp.log(sa)                                    # log-softmax at ya
    lp_b = tb - jnp.log(sb)                                    # log-softmax at yb

    part_a = jnp.sum(jnp.where(valid, lp_a, 0.0))              # per-tile partial sums
    part_b = jnp.sum(jnp.where(valid, lp_b, 0.0))

    # lane-dense (8,128) output block: lane0 = sum(lp_a), lane1 = sum(lp_b)
    out_lane = lax.broadcasted_iota(jnp.int32, (1, _OUT_LANES), 1)
    row = jnp.where(out_lane == 0, part_a, jnp.where(out_lane == 1, part_b, 0.0))
    out_ref[...] = jnp.broadcast_to(row, out_ref.shape)


# --------------------------------------------------------------------------- #
# One-time parameter preparation (init-time, NOT per training step)
# --------------------------------------------------------------------------- #
def prepare_snapmix_eql_params(W, b, freq_info, lam_thresh, *, lane_multiple=None):
    """Pre-transpose / pre-pad / pre-cast the classifier params once."""
    if lane_multiple is None:
        lane_multiple, _ = _generation_config()
    C, F = W.shape
    C_pad = _round_up(max(C, lane_multiple), lane_multiple)
    wT = jnp.zeros((F, C_pad), jnp.float32).at[:, :C].set(
        jnp.asarray(W, jnp.float32).T).astype(jnp.bfloat16)
    b2 = jnp.full((1, C_pad), _NEG_BIG, jnp.float32).at[0, :C].set(
        jnp.asarray(b, jnp.float32))
    thre = (jnp.asarray(freq_info, jnp.float32) < lam_thresh).astype(jnp.float32)
    thre_pad = jnp.zeros((1, C_pad), jnp.float32).at[0, :C].set(thre)
    return {"wT_pad": wT, "b_pad": b2, "thre_pad": thre_pad,
            "C": C, "C_pad": C_pad, "F": F}


def _pick_block_b(B, F, C_pad, vmem_limit, x_buffers, block_b):
    if block_b is None:
        budget = int(vmem_limit * 0.75)                        # headroom
        resident = F * C_pad * 2 + 2 * 8 * C_pad * 4           # wT bf16 + bias/mask
        per_row = (x_buffers * F * 4                           # streamed f32 x bufs
                   + 2 * _OUT_LANES * 4                        # side block (lane pad)
                   + 2 * C_pad * 4                             # logits + exp temps
                   + F * 2)                                    # in-kernel bf16 x copy
        bt = (budget - resident) // max(per_row, 1)
        bt = max(16, min(2048, (bt // 16) * 16))
    else:
        bt = max(16, _round_up(block_b, 16))                   # bf16 packs 2 rows/sublane
    return min(bt, _round_up(B, 16))


# --------------------------------------------------------------------------- #
# Wrapper: training-mode forward of SnapMixEQLoss (reback=None)
# --------------------------------------------------------------------------- #
def snapmix_eql_loss(x, ya, yb, lam_a, lam_b, *, prepared, gamma,
                     loss_weight=1.0, rng_key=None, block_b=None, x_buffers=2):
    B, F = x.shape
    C, C_pad = prepared["C"], prepared["C_pad"]
    assert F == prepared["F"]

    _, vmem_limit = _generation_config()

    # per-call stochastic exclude mask (C elements, tiny) * static threshold mask
    if rng_key is None:
        rng_key = jax.random.PRNGKey(0)
    beta = jax.random.uniform(rng_key, (C,), dtype=jnp.float32)
    wbeta_pad = jnp.zeros((1, C_pad), jnp.float32).at[0, :C].set(
        (beta < gamma).astype(jnp.float32))
    wbt2 = wbeta_pad * prepared["thre_pad"]

    bt = _pick_block_b(B, F, C_pad, vmem_limit, x_buffers, block_b)
    n_tiles = pl.cdiv(B, bt)

    # merged side array (ya | yb | valid): one tiny DMA per tile instead of 3;
    # x itself stays un-padded — the ragged last tile is masked via `valid`.
    side = jnp.zeros((n_tiles * bt, 3), jnp.int32)
    side = side.at[:B, 0].set(ya.astype(jnp.int32))
    side = side.at[:B, 1].set(yb.astype(jnp.int32))
    side = side.at[:B, 2].set(1)

    def build_call(use_buffer_hints):
        resident = {"pipeline_mode": pl.Buffered(1)} if use_buffer_hints else {}
        x_kw = ({"pipeline_mode": pl.Buffered(x_buffers)}
                if (use_buffer_hints and x_buffers != 2) else {})
        return pl.pallas_call(
            _snapmix_eql_kernel,
            out_shape=jax.ShapeDtypeStruct((n_tiles * 8, _OUT_LANES), jnp.float32),
            grid_spec=pltpu.PrefetchScalarGridSpec(
                num_scalar_prefetch=0,
                grid=(n_tiles,),
                in_specs=[
                    pl.BlockSpec((bt, F), lambda i: (i, 0), **x_kw),         # x stream
                    pl.BlockSpec((F, C_pad), lambda i: (0, 0), **resident),  # W^T resident
                    pl.BlockSpec((1, C_pad), lambda i: (0, 0), **resident),  # bias resident
                    pl.BlockSpec((1, C_pad), lambda i: (0, 0), **resident),  # beta*thre mask
                    pl.BlockSpec((bt, 3), lambda i: (i, 0)),                 # ya|yb|valid
                ],
                out_specs=pl.BlockSpec((8, _OUT_LANES), lambda i: (i, 0)),
            ),
            compiler_params=pltpu.CompilerParams(
                dimension_semantics=("parallel",),     # batch tiles -> both TCs on v7x
                vmem_limit_bytes=vmem_limit,
            ),
        )

    args = (x, prepared["wT_pad"], prepared["b_pad"], wbt2, side)
    try:
        out = build_call(True)(*args)
    except Exception:
        # fallback for JAX versions without BlockSpec.pipeline_mode support
        out = build_call(False)(*args)

    parts = out.reshape(n_tiles, 8, _OUT_LANES)[:, 0, :]        # (n_tiles, 128)
    nll_a = -jnp.sum(parts[:, 0]) / B                           # F.nll_loss mean (ya)
    nll_b = -jnp.sum(parts[:, 1]) / B                           # F.nll_loss mean (yb)
    # mean(nll_a*lam_a + nll_b*lam_b) factors exactly into the lam means.
    loss = (nll_a * jnp.mean(jnp.asarray(lam_a, jnp.float32))
            + nll_b * jnp.mean(jnp.asarray(lam_b, jnp.float32)))
    return loss * jnp.float32(loss_weight)


# --------------------------------------------------------------------------- #
# Pure-JAX reference (true f32 nn.Linear semantics, naive PyTorch formula)
# --------------------------------------------------------------------------- #
def _reference(x, ya, yb, lam_a, lam_b, W, b, gamma, lam_thresh, freq_info,
               loss_weight, rng_key):
    B = x.shape[0]
    C = W.shape[0]
    logits = jnp.dot(x, W.T) + b
    beta = jax.random.uniform(rng_key, (C,), dtype=jnp.float32)
    wbeta = (beta < gamma).astype(jnp.float32)
    wthre = (jnp.asarray(freq_info, jnp.float32) < lam_thresh).astype(jnp.float32)
    oh_a = jax.nn.one_hot(ya, C, dtype=jnp.float32)
    oh_b = jax.nn.one_hot(yb, C, dtype=jnp.float32)
    eqw_a = 1 - wbeta * wthre * (1 - oh_a)
    eqw_b = 1 - wbeta * wthre * (1 - oh_b)
    e = jnp.exp(logits)
    sa = jnp.sum(eqw_a * e, axis=1, keepdims=True)
    sb = jnp.sum(eqw_b * e, axis=1, keepdims=True)
    la = jnp.log(e / sa)
    lb = jnp.log(e / sb)
    nll_a = -jnp.mean(la[jnp.arange(B), ya])
    nll_b = -jnp.mean(lb[jnp.arange(B), yb])
    return jnp.mean(nll_a * lam_a + nll_b * lam_b) * loss_weight


if __name__ == "__main__":
    key = jax.random.PRNGKey(0)
    k_w, k_b, k_x, k_ya, k_yb, k_la, k_beta = jax.random.split(key, 7)

    B, in_feat, num_classes = 48, 128, 5
    gamma = 0.9
    lam_thresh = 0.03
    loss_weight = 1.0
    freq_info = jnp.array([0.5, 0.2, 0.15, 0.01, 0.005], dtype=jnp.float32)

    # deterministic "nn.Linear(in_feat, num_classes)" params
    W = jax.random.normal(k_w, (num_classes, in_feat), jnp.float32) * 0.05
    b = jax.random.normal(k_b, (num_classes,), jnp.float32) * 0.01

    x = jax.random.normal(k_x, (B, in_feat), jnp.float32)
    ya = jax.random.randint(k_ya, (B,), 0, num_classes)
    yb = jax.random.randint(k_yb, (B,), 0, num_classes)
    lam_a = jax.random.uniform(k_la, (B,), jnp.float32)
    lam_b = 1.0 - lam_a

    prepared = prepare_snapmix_eql_params(W, b, freq_info, lam_thresh)

    loss = snapmix_eql_loss(x, ya, yb, lam_a, lam_b, prepared=prepared,
                            gamma=gamma, loss_weight=loss_weight,
                            rng_key=k_beta, block_b=16)   # 3 batch tiles -> grid exercised
    loss = jax.block_until_ready(loss)

    ref = _reference(x, ya, yb, lam_a, lam_b, W, b, gamma, lam_thresh,
                     freq_info, loss_weight, k_beta)
    # bf16 MXU inputs vs. the f32 PyTorch Linear -> compare with bf16-level tolerance
    assert jnp.allclose(loss, ref, rtol=2e-2, atol=2e-2), (loss, ref)

    print("KERNEL_OK")
</pallas_src>

<mosaic_0001>
module attributes {stable_mosaic.version = 11 : i64} {
  func.func @_snapmix_eql_kernel(%arg0: i32, %arg1: memref<16x128xf32, #tpu.memory_space<vmem>>, %arg2: memref<128x128xbf16, #tpu.memory_space<vmem>>, %arg3: memref<1x128xf32, #tpu.memory_space<vmem>>, %arg4: memref<1x128xf32, #tpu.memory_space<vmem>>, %arg5: memref<16x3xi32, #tpu.memory_space<vmem>>, %arg6: memref<8x128xf32, #tpu.memory_space<vmem>>) attributes {dimension_semantics = [#tpu.dimension_semantics<parallel>], iteration_bounds = array<i64: 3>, scalar_prefetch = 0 : i64, scratch_operands = 0 : i64, tpu.core_type = #tpu.core_type<tc>, window_params = [{transform_indices = @transform_0, window_bounds = array<i64: 16, 128>}, {pipeline_mode = #tpu.pipeline_mode<synchronous>, transform_indices = @transform_1, window_bounds = array<i64: 128, 128>}, {pipeline_mode = #tpu.pipeline_mode<synchronous>, transform_indices = @transform_2, window_bounds = array<i64: 1, 128>}, {pipeline_mode = #tpu.pipeline_mode<synchronous>, transform_indices = @transform_3, window_bounds = array<i64: 1, 128>}, {transform_indices = @transform_4, window_bounds = array<i64: 16, 3>}, {transform_indices = @transform_5, window_bounds = array<i64: 8, 128>}]} {
    %c0 = arith.constant 0 : index
    %c0_0 = arith.constant 0 : index
    %0 = vector.load %arg1[%c0, %c0_0] : memref<16x128xf32, #tpu.memory_space<vmem>>, vector<16x128xf32>
    %1 = arith.truncf %0 : vector<16x128xf32> to vector<16x128xbf16>
    %c0_1 = arith.constant 0 : index
    %c0_2 = arith.constant 0 : index
    %2 = vector.load %arg2[%c0_1, %c0_2] : memref<128x128xbf16, #tpu.memory_space<vmem>>, vector<128x128xbf16>
    %cst = arith.constant dense<0.000000e+00> : vector<16x128xf32>
    %3 = tpu.matmul %1, %2, %cst {dimension_numbers = #tpu.dot_dimension_numbers<[1], [0], [0], [1], [0, 0, 1, 1], [], []>} : vector<16x128xbf16>, vector<128x128xbf16>, vector<16x128xf32> -> vector<16x128xf32>
    %c0_3 = arith.constant 0 : index
    %c0_4 = arith.constant 0 : index
    %4 = vector.load %arg3[%c0_3, %c0_4] : memref<1x128xf32, #tpu.memory_space<vmem>>, vector<1x128xf32>
    %5 = vector.broadcast %4 : vector<1x128xf32> to vector<16x128xf32>
    %6 = arith.addf %3, %5 : vector<16x128xf32>
    %cst_5 = arith.constant dense<0xFF800000> : vector<16xf32>
    %7 = vector.multi_reduction <maximumf>, %6, %cst_5 [1] : vector<16x128xf32> to vector<16xf32>
    %8 = vector.shape_cast %7 : vector<16xf32> to vector<16x1xf32>
    %9 = vector.broadcast %8 : vector<16x1xf32> to vector<16x128xf32>
    %10 = arith.subf %6, %9 : vector<16x128xf32>
    %11 = math.exp %10 : vector<16x128xf32>
    %c0_6 = arith.constant 0 : index
    %c0_7 = arith.constant 0 : index
    %12 = vector.load %arg4[%c0_6, %c0_7] : memref<1x128xf32, #tpu.memory_space<vmem>>, vector<1x128xf32>
    %cst_8 = arith.constant 1.000000e+00 : f32
    %13 = vector.broadcast %cst_8 : f32 to vector<1x128xf32>
    %14 = arith.subf %13, %12 : vector<1x128xf32>
    %15 = vector.broadcast %14 : vector<1x128xf32> to vector<16x128xf32>
    %16 = arith.mulf %15, %11 : vector<16x128xf32>
    %cst_9 = arith.constant dense<0.000000e+00> : vector<16xf32>
    %17 = vector.multi_reduction <add>, %16, %cst_9 [1] : vector<16x128xf32> to vector<16xf32>
    %18 = vector.shape_cast %17 : vector<16xf32> to vector<16x1xf32>
    %c0_10 = arith.constant 0 : index
    %c0_11 = arith.constant 0 : index
    %19 = vector.load %arg5[%c0_10, %c0_11] : memref<16x3xi32, #tpu.memory_space<vmem>>, vector<16x3xi32>
    %20 = vector.extract_strided_slice %19 {offsets = [0, 0], sizes = [16, 1], strides = [1, 1]} : vector<16x3xi32> to vector<16x1xi32>
    %21 = vector.extract_strided_slice %19 {offsets = [0, 1], sizes = [16, 1], strides = [1, 1]} : vector<16x3xi32> to vector<16x1xi32>
    %22 = vector.extract_strided_slice %19 {offsets = [0, 2], sizes = [16, 1], strides = [1, 1]} : vector<16x3xi32> to vector<16x1xi32>
    %c0_i32 = arith.constant 0 : i32
    %23 = vector.broadcast %c0_i32 : i32 to vector<16x1xi32>
    %24 = arith.cmpi sgt, %22, %23 : vector<16x1xi32>
    %25 = tpu.iota {dimensions = array<i32: 1>} : vector<1x128xi32>
    %26 = vector.broadcast %25 : vector<1x128xi32> to vector<16x128xi32>
    %27 = vector.broadcast %20 : vector<16x1xi32> to vector<16x128xi32>
    %28 = arith.cmpi eq, %26, %27 : vector<16x128xi32>
    %29 = vector.broadcast %25 : vector<1x128xi32> to vector<16x128xi32>
    %30 = vector.broadcast %21 : vector<16x1xi32> to vector<16x128xi32>
    %31 = arith.cmpi eq, %29, %30 : vector<16x128xi32>
    %cst_12 = arith.constant 0.000000e+00 : f32
    %32 = vector.broadcast %cst_12 : f32 to vector<16x128xf32>
    %33 = arith.select %28, %6, %32 : vector<16x128xi1>, vector<16x128xf32>
    %cst_13 = arith.constant dense<0.000000e+00> : vector<16xf32>
    %34 = vector.multi_reduction <add>, %33, %cst_13 [1] : vector<16x128xf32> to vector<16xf32>
    %35 = vector.shape_cast %34 : vector<16xf32> to vector<16x1xf32>
    %36 = arith.subf %35, %8 : vector<16x1xf32>
    %cst_14 = arith.constant 0.000000e+00 : f32
    %37 = vector.broadcast %cst_14 : f32 to vector<16x128xf32>
    %38 = arith.select %31, %6, %37 : vector<16x128xi1>, vector<16x128xf32>
    %cst_15 = arith.constant dense<0.000000e+00> : vector<16xf32>
    %39 = vector.multi_reduction <add>, %38, %cst_15 [1] : vector<16x128xf32> to vector<16xf32>
    %40 = vector.shape_cast %39 : vector<16xf32> to vector<16x1xf32>
    %41 = arith.subf %40, %8 : vector<16x1xf32>
    %cst_16 = arith.constant 0.000000e+00 : f32
    %42 = vector.shape_cast %12 : vector<1x128xf32> to vector<1x128xf32>
    %43 = vector.broadcast %42 : vector<1x128xf32> to vector<16x128xf32>
    %44 = vector.broadcast %cst_16 : f32 to vector<16x128xf32>
    %45 = arith.select %28, %43, %44 : vector<16x128xi1>, vector<16x128xf32>
    %cst_17 = arith.constant dense<0.000000e+00> : vector<16xf32>
    %46 = vector.multi_reduction <add>, %45, %cst_17 [1] : vector<16x128xf32> to vector<16xf32>
    %47 = vector.shape_cast %46 : vector<16xf32> to vector<16x1xf32>
    %cst_18 = arith.constant 0.000000e+00 : f32
    %48 = vector.shape_cast %12 : vector<1x128xf32> to vector<1x128xf32>
    %49 = vector.broadcast %48 : vector<1x128xf32> to vector<16x128xf32>
    %50 = vector.broadcast %cst_18 : f32 to vector<16x128xf32>
    %51 = arith.select %31, %49, %50 : vector<16x128xi1>, vector<16x128xf32>
    %cst_19 = arith.constant dense<0.000000e+00> : vector<16xf32>
    %52 = vector.multi_reduction <add>, %51, %cst_19 [1] : vector<16x128xf32> to vector<16xf32>
    %53 = vector.shape_cast %52 : vector<16xf32> to vector<16x1xf32>
    %54 = math.exp %36 : vector<16x1xf32>
    %55 = arith.mulf %47, %54 : vector<16x1xf32>
    %56 = arith.addf %18, %55 : vector<16x1xf32>
    %cst_20 = arith.constant 1.000000e-30 : f32
    %57 = vector.broadcast %cst_20 : f32 to vector<16x1xf32>
    %58 = arith.maximumf %56, %57 : vector<16x1xf32>
    %59 = math.exp %41 : vector<16x1xf32>
    %60 = arith.mulf %53, %59 : vector<16x1xf32>
    %61 = arith.addf %18, %60 : vector<16x1xf32>
    %cst_21 = arith.constant 1.000000e-30 : f32
    %62 = vector.broadcast %cst_21 : f32 to vector<16x1xf32>
    %63 = arith.maximumf %61, %62 : vector<16x1xf32>
    %64 = math.log %58 : vector<16x1xf32>
    %65 = arith.subf %36, %64 : vector<16x1xf32>
    %66 = math.log %63 : vector<16x1xf32>
    %67 = arith.subf %41, %66 : vector<16x1xf32>
    %cst_22 = arith.constant 0.000000e+00 : f32
    %68 = vector.broadcast %cst_22 : f32 to vector<16x1xf32>
    %69 = arith.select %24, %65, %68 : vector<16x1xi1>, vector<16x1xf32>
    %70 = vector.shape_cast %69 : vector<16x1xf32> to vector<1x16x1xf32>
    %cst_23 = arith.constant dense<0.000000e+00> : vector<1xf32>
    %71 = vector.multi_reduction <add>, %70, %cst_23 [1, 2] : vector<1x16x1xf32> to vector<1xf32>
    %72 = vector.shape_cast %71 : vector<1xf32> to vector<1x1x1xf32>
    %73 = vector.extract %72[0, 0, 0] : f32 from vector<1x1x1xf32>
    %cst_24 = arith.constant 0.000000e+00 : f32
    %74 = vector.broadcast %cst_24 : f32 to vector<16x1xf32>
    %75 = arith.select %24, %67, %74 : vector<16x1xi1>, vector<16x1xf32>
    %76 = vector.shape_cast %75 : vector<16x1xf32> to vector<1x16x1xf32>
    %cst_25 = arith.constant dense<0.000000e+00> : vector<1xf32>
    %77 = vector.multi_reduction <add>, %76, %cst_25 [1, 2] : vector<1x16x1xf32> to vector<1xf32>
    %78 = vector.shape_cast %77 : vector<1xf32> to vector<1x1x1xf32>
    %79 = vector.extract %78[0, 0, 0] : f32 from vector<1x1x1xf32>
    %80 = tpu.iota {dimensions = array<i32: 1>} : vector<1x128xi32>
    %c0_i32_26 = arith.constant 0 : i32
    %81 = vector.broadcast %c0_i32_26 : i32 to vector<1x128xi32>
    %82 = arith.cmpi eq, %80, %81 : vector<1x128xi32>
    %c1_i32 = arith.constant 1 : i32
    %83 = vector.broadcast %c1_i32 : i32 to vector<1x128xi32>
    %84 = arith.cmpi eq, %80, %83 : vector<1x128xi32>
    %cst_27 = arith.constant 0.000000e+00 : f32
    %85 = vector.broadcast %79 : f32 to vector<1x128xf32>
    %86 = vector.broadcast %cst_27 : f32 to vector<1x128xf32>
    %87 = arith.select %84, %85, %86 : vector<1x128xi1>, vector<1x128xf32>
    %88 = vector.broadcast %73 : f32 to vector<1x128xf32>
    %89 = arith.select %82, %88, %87 : vector<1x128xi1>, vector<1x128xf32>
    %90 = vector.shape_cast %89 : vector<1x128xf32> to vector<1x128xf32>
    %91 = vector.broadcast %90 : vector<1x128xf32> to vector<8x128xf32>
    %c0_28 = arith.constant 0 : index
    %c0_29 = arith.constant 0 : index
    %92 = vector.load %arg6[%c0_28, %c0_29] : memref<8x128xf32, #tpu.memory_space<vmem>>, vector<8x128xf32>
    tpu.vector_store %arg6[%c0_28, %c0_29], %91 {strides = array<i32>} : memref<8x128xf32, #tpu.memory_space<vmem>>, vector<8x128xf32>,
    return
  }
  func.func @transform_0(%arg0: i32) -> (i32, i32) {
    %c0_i32 = arith.constant 0 : i32
    %c0_i32_0 = arith.constant 0 : i32
    return %arg0, %c0_i32 : i32, i32
  }
  func.func @transform_1(%arg0: i32) -> (i32, i32) {
    %c0_i32 = arith.constant 0 : i32
    %c0_i32_0 = arith.constant 0 : i32
    %c0_i32_1 = arith.constant 0 : i32
    return %c0_i32, %c0_i32_0 : i32, i32
  }
  func.func @transform_2(%arg0: i32) -> (i32, i32) {
    %c0_i32 = arith.constant 0 : i32
    %c0_i32_0 = arith.constant 0 : i32
    %c0_i32_1 = arith.constant 0 : i32
    return %c0_i32, %c0_i32_0 : i32, i32
  }
  func.func @transform_3(%arg0: i32) -> (i32, i32) {
    %c0_i32 = arith.constant 0 : i32
    %c0_i32_0 = arith.constant 0 : i32
    %c0_i32_1 = arith.constant 0 : i32
    return %c0_i32, %c0_i32_0 : i32, i32
  }
  func.func @transform_4(%arg0: i32) -> (i32, i32) {
    %c0_i32 = arith.constant 0 : i32
    %c0_i32_0 = arith.constant 0 : i32
    return %arg0, %c0_i32 : i32, i32
  }
  func.func @transform_5(%arg0: i32) -> (i32, i32) {
    %c0_i32 = arith.constant 0 : i32
    %c0_i32_0 = arith.constant 0 : i32
    return %arg0, %c0_i32 : i32, i32
  }
}

module attributes {stable_mosaic.version = 11 : i64} {
  func.func @_snapmix_eql_kernel(%arg0: i32, %arg1: memref<16x128xf32, #tpu.memory_space<vmem>>, %arg2: memref<128x128xbf16, #tpu.memory_space<vmem>>, %arg3: memref<1x128xf32, #tpu.memory_space<vmem>>, %arg4: memref<1x128xf32, #tpu.memory_space<vmem>>, %arg5: memref<16x3xi32, #tpu.memory_space<vmem>>, %arg6: memref<8x128xf32, #tpu.memory_space<vmem>>) attributes {dimension_semantics = [#tpu.dimension_semantics<parallel>], iteration_bounds = array<i64: 3>, scalar_prefetch = 0 : i64, scratch_operands = 0 : i64, tpu.core_type = #tpu.core_type<tc>, window_params = [{transform_indices = @transform_0, window_bounds = array<i64: 16, 128>}, {pipeline_mode = #tpu.pipeline_mode<synchronous>, transform_indices = @transform_1, window_bounds = array<i64: 128, 128>}, {pipeline_mode = #tpu.pipeline_mode<synchronous>, transform_indices = @transform_2, window_bounds = array<i64: 1, 128>}, {pipeline_mode = #tpu.pipeline_mode<synchronous>, transform_indices = @transform_3, window_bounds = array<i64: 1, 128>}, {transform_indices = @transform_4, window_bounds = array<i64: 16, 3>}, {transform_indices = @transform_5, window_bounds = array<i64: 8, 128>}]} {
    %c0 = arith.constant 0 : index
    %c0_0 = arith.constant 0 : index
    %0 = vector.load %arg1[%c0, %c0_0] : memref<16x128xf32, #tpu.memory_space<vmem>>, vector<16x128xf32>
    %1 = arith.truncf %0 : vector<16x128xf32> to vector<16x128xbf16>
    %c0_1 = arith.constant 0 : index
    %c0_2 = arith.constant 0 : index
    %2 = vector.load %arg2[%c0_1, %c0_2] : memref<128x128xbf16, #tpu.memory_space<vmem>>, vector<128x128xbf16>
    %cst = arith.constant dense<0.000000e+00> : vector<16x128xf32>
    %3 = tpu.matmul %1, %2, %cst {dimension_numbers = #tpu.dot_dimension_numbers<[1], [0], [0], [1], [0, 0, 1, 1], [], []>} : vector<16x128xbf16>, vector<128x128xbf16>, vector<16x128xf32> -> vector<16x128xf32>
    %c0_3 = arith.constant 0 : index
    %c0_4 = arith.constant 0 : index
    %4 = vector.load %arg3[%c0_3, %c0_4] : memref<1x128xf32, #tpu.memory_space<vmem>>, vector<1x128xf32>
    %5 = vector.broadcast %4 : vector<1x128xf32> to vector<16x128xf32>
    %6 = arith.addf %3, %5 : vector<16x128xf32>
    %cst_5 = arith.constant dense<0xFF800000> : vector<16xf32>
    %7 = vector.multi_reduction <maximumf>, %6, %cst_5 [1] : vector<16x128xf32> to vector<16xf32>
    %8 = vector.shape_cast %7 : vector<16xf32> to vector<16x1xf32>
    %9 = vector.broadcast %8 : vector<16x1xf32> to vector<16x128xf32>
    %10 = arith.subf %6, %9 : vector<16x128xf32>
    %11 = math.exp %10 : vector<16x128xf32>
    %c0_6 = arith.constant 0 : index
    %c0_7 = arith.constant 0 : index
    %12 = vector.load %arg4[%c0_6, %c0_7] : memref<1x128xf32, #tpu.memory_space<vmem>>, vector<1x128xf32>
    %cst_8 = arith.constant 1.000000e+00 : f32
    %13 = vector.broadcast %cst_8 : f32 to vector<1x128xf32>
    %14 = arith.subf %13, %12 : vector<1x128xf32>
    %15 = vector.broadcast %14 : vector<1x128xf32> to vector<16x128xf32>
    %16 = arith.mulf %15, %11 : vector<16x128xf32>
    %cst_9 = arith.constant dense<0.000000e+00> : vector<16xf32>
    %17 = vector.multi_reduction <add>, %16, %cst_9 [1] : vector<16x128xf32> to vector<16xf32>
    %18 = vector.shape_cast %17 : vector<16xf32> to vector<16x1xf32>
    %c0_10 = arith.constant 0 : index
    %c0_11 = arith.constant 0 : index
    %19 = vector.load %arg5[%c0_10, %c0_11] : memref<16x3xi32, #tpu.memory_space<vmem>>, vector<16x3xi32>
    %20 = vector.extract_strided_slice %19 {offsets = [0, 0], sizes = [16, 1], strides = [1, 1]} : vector<16x3xi32> to vector<16x1xi32>
    %21 = vector.extract_strided_slice %19 {offsets = [0, 1], sizes = [16, 1], strides = [1, 1]} : vector<16x3xi32> to vector<16x1xi32>
    %22 = vector.extract_strided_slice %19 {offsets = [0, 2], sizes = [16, 1], strides = [1, 1]} : vector<16x3xi32> to vector<16x1xi32>
    %c0_i32 = arith.constant 0 : i32
    %23 = vector.broadcast %c0_i32 : i32 to vector<16x1xi32>
    %24 = arith.cmpi sgt, %22, %23 : vector<16x1xi32>
    %25 = tpu.iota {dimensions = array<i32: 1>} : vector<1x128xi32>
    %26 = vector.broadcast %25 : vector<1x128xi32> to vector<16x128xi32>
    %27 = vector.broadcast %20 : vector<16x1xi32> to vector<16x128xi32>
    %28 = arith.cmpi eq, %26, %27 : vector<16x128xi32>
    %29 = vector.broadcast %25 : vector<1x128xi32> to vector<16x128xi32>
    %30 = vector.broadcast %21 : vector<16x1xi32> to vector<16x128xi32>
    %31 = arith.cmpi eq, %29, %30 : vector<16x128xi32>
    %cst_12 = arith.constant 0.000000e+00 : f32
    %32 = vector.broadcast %cst_12 : f32 to vector<16x128xf32>
    %33 = arith.select %28, %6, %32 : vector<16x128xi1>, vector<16x128xf32>
    %cst_13 = arith.constant dense<0.000000e+00> : vector<16xf32>
    %34 = vector.multi_reduction <add>, %33, %cst_13 [1] : vector<16x128xf32> to vector<16xf32>
    %35 = vector.shape_cast %34 : vector<16xf32> to vector<16x1xf32>
    %36 = arith.subf %35, %8 : vector<16x1xf32>
    %cst_14 = arith.constant 0.000000e+00 : f32
    %37 = vector.broadcast %cst_14 : f32 to vector<16x128xf32>
    %38 = arith.select %31, %6, %37 : vector<16x128xi1>, vector<16x128xf32>
    %cst_15 = arith.constant dense<0.000000e+00> : vector<16xf32>
    %39 = vector.multi_reduction <add>, %38, %cst_15 [1] : vector<16x128xf32> to vector<16xf32>
    %40 = vector.shape_cast %39 : vector<16xf32> to vector<16x1xf32>
    %41 = arith.subf %40, %8 : vector<16x1xf32>
    %cst_16 = arith.constant 0.000000e+00 : f32
    %42 = vector.shape_cast %12 : vector<1x128xf32> to vector<1x128xf32>
    %43 = vector.broadcast %42 : vector<1x128xf32> to vector<16x128xf32>
    %44 = vector.broadcast %cst_16 : f32 to vector<16x128xf32>
    %45 = arith.select %28, %43, %44 : vector<16x128xi1>, vector<16x128xf32>
    %cst_17 = arith.constant dense<0.000000e+00> : vector<16xf32>
    %46 = vector.multi_reduction <add>, %45, %cst_17 [1] : vector<16x128xf32> to vector<16xf32>
    %47 = vector.shape_cast %46 : vector<16xf32> to vector<16x1xf32>
    %cst_18 = arith.constant 0.000000e+00 : f32
    %48 = vector.shape_cast %12 : vector<1x128xf32> to vector<1x128xf32>
    %49 = vector.broadcast %48 : vector<1x128xf32> to vector<16x128xf32>
    %50 = vector.broadcast %cst_18 : f32 to vector<16x128xf32>
    %51 = arith.select %31, %49, %50 : vector<16x128xi1>, vector<16x128xf32>
    %cst_19 = arith.constant dense<0.000000e+00> : vector<16xf32>
    %52 = vector.multi_reduction <add>, %51, %cst_19 [1] : vector<16x128xf32> to vector<16xf32>
    %53 = vector.shape_cast %52 : vector<16xf32> to vector<16x1xf32>
    %54 = math.exp %36 : vector<16x1xf32>
    %55 = arith.mulf %47, %54 : vector<16x1xf32>
    %56 = arith.addf %18, %55 : vector<16x1xf32>
    %cst_20 = arith.constant 1.000000e-30 : f32
    %57 = vector.broadcast %cst_20 : f32 to vector<16x1xf32>
    %58 = arith.maximumf %56, %57 : vector<16x1xf32>
    %59 = math.exp %41 : vector<16x1xf32>
    %60 = arith.mulf %53, %59 : vector<16x1xf32>
    %61 = arith.addf %18, %60 : vector<16x1xf32>
    %cst_21 = arith.constant 1.000000e-30 : f32
    %62 = vector.broadcast %cst_21 : f32 to vector<16x1xf32>
    %63 = arith.maximumf %61, %62 : vector<16x1xf32>
    %64 = math.log %58 : vector<16x1xf32>
    %65 = arith.subf %36, %64 : vector<16x1xf32>
    %66 = math.log %63 : vector<16x1xf32>
    %67 = arith.subf %41, %66 : vector<16x1xf32>
    %cst_22 = arith.constant 0.000000e+00 : f32
    %68 = vector.broadcast %cst_22 : f32 to vector<16x1xf32>
    %69 = arith.select %24, %65, %68 : vector<16x1xi1>, vector<16x1xf32>
    %70 = vector.shape_cast %69 : vector<16x1xf32> to vector<1x16x1xf32>
    %cst_23 = arith.constant dense<0.000000e+00> : vector<1xf32>
    %71 = vector.multi_reduction <add>, %70, %cst_23 [1, 2] : vector<1x16x1xf32> to vector<1xf32>
    %72 = vector.shape_cast %71 : vector<1xf32> to vector<1x1x1xf32>
    %73 = vector.extract %72[0, 0, 0] : f32 from vector<1x1x1xf32>
    %cst_24 = arith.constant 0.000000e+00 : f32
    %74 = vector.broadcast %cst_24 : f32 to vector<16x1xf32>
    %75 = arith.select %24, %67, %74 : vector<16x1xi1>, vector<16x1xf32>
    %76 = vector.shape_cast %75 : vector<16x1xf32> to vector<1x16x1xf32>
    %cst_25 = arith.constant dense<0.000000e+00> : vector<1xf32>
    %77 = vector.multi_reduction <add>, %76, %cst_25 [1, 2] : vector<1x16x1xf32> to vector<1xf32>
    %78 = vector.shape_cast %77 : vector<1xf32> to vector<1x1x1xf32>
    %79 = vector.extract %78[0, 0, 0] : f32 from vector<1x1x1xf32>
    %80 = tpu.iota {dimensions = array<i32: 1>} : vector<1x128xi32>
    %c0_i32_26 = arith.constant 0 : i32
    %81 = vector.broadcast %c0_i32_26 : i32 to vector<1x128xi32>
    %82 = arith.cmpi eq, %80, %81 : vector<1x128xi32>
    %c1_i32 = arith.constant 1 : i32
    %83 = vector.broadcast %c1_i32 : i32 to vector<1x128xi32>
    %84 = arith.cmpi eq, %80, %83 : vector<1x128xi32>
    %cst_27 = arith.constant 0.000000e+00 : f32
    %85 = vector.broadcast %79 : f32 to vector<1x128xf32>
    %86 = vector.broadcast %cst_27 : f32 to vector<1x128xf32>
    %87 = arith.select %84, %85, %86 : vector<1x128xi1>, vector<1x128xf32>
    %88 = vector.broadcast %73 : f32 to vector<1x128xf32>
    %89 = arith.select %82, %88, %87 : vector<1x128xi1>, vector<1x128xf32>
    %90 = vector.shape_cast %89 : vector<1x128xf32> to vector<1x128xf32>
    %91 = vector.broadcast %90 : vector<1x128xf32> to vector<8x128xf32>
    %c0_28 = arith.constant 0 : index
    %c0_29 = arith.constant 0 : index
    %92 = vector.load %arg6[%c0_28, %c0_29] : memref<8x128xf32, #tpu.memory_space<vmem>>, vector<8x128xf32>
    tpu.vector_store %arg6[%c0_28, %c0_29], %91 {strides = array<i32>} : memref<8x128xf32, #tpu.memory_space<vmem>>, vector<8x128xf32>,
    return
  }
  func.func @transform_0(%arg0: i32) -> (i32, i32) {
    %c0_i32 = arith.constant 0 : i32
    %c0_i32_0 = arith.constant 0 : i32
    return %arg0, %c0_i32 : i32, i32
  }
  func.func @transform_1(%arg0: i32) -> (i32, i32) {
    %c0_i32 = arith.constant 0 : i32
    %c0_i32_0 = arith.constant 0 : i32
    %c0_i32_1 = arith.constant 0 : i32
    return %c0_i32, %c0_i32_0 : i32, i32
  }
  func.func @transform_2(%arg0: i32) -> (i32, i32) {
    %c0_i32 = arith.constant 0 : i32
    %c0_i32_0 = arith.constant 0 : i32
    %c0_i32_1 = arith.constant 0 : i32
    return %c0_i32, %c0_i32_0 : i32, i32
  }
  func.func @transform_3(%arg0: i32) -> (i32, i32) {
    %c0_i32 = arith.constant 0 : i32
    %c0_i32_0 = arith.constant 0 : i32
    %c0_i32_1 = arith.constant 0 : i32
    return %c0_i32, %c0_i32_0 : i32, i32
  }
  func.func @transform_4(%arg0: i32) -> (i32, i32) {
    %c0_i32 = arith.constant 0 : i32
    %c0_i32_0 = arith.constant 0 : i32
    return %arg0, %c0_i32 : i32, i32
  }
  func.func @transform_5(%arg0: i32) -> (i32, i32) {
    %c0_i32 = arith.constant 0 : i32
    %c0_i32_0 = arith.constant 0 : i32
    return %arg0, %c0_i32 : i32, i32
  }
}

</mosaic_0001>

<llo_original>
// kernel: tpu_custom_call.1
$region0: #{tpu_custom_call.1}
  #allocation0 [shape = 'u32[]', space=smem, size = 0x4, offset = 0x4, fixed_abs, tag = 'smem constant byte address 0x4 - core index']
  #allocation1 [shape = 'u32[72,128]{1,0:T(1,128)}', space=vmem, size = 0x9000, scoped, tag = 'internal scratch']
  %s0 = inlined_call_operand.vmem [shape: f32[48,128], index: 0, kind: input, shape index: {}]
  %s1 = inlined_call_operand.hbm [shape: bf16[128,128], index: 1, kind: input, shape index: {}]
  %s2 = inlined_call_operand.vmem [shape: f32[1,128], index: 2, kind: input, shape index: {}]
  %s3 = inlined_call_operand.vmem [shape: f32[1,128], index: 3, kind: input, shape index: {}]
  %s4 = inlined_call_operand.vmem [shape: s32[48,3], index: 4, kind: input, shape index: {}]
  %s5 = inlined_call_operand.hbm [shape: f32[24,128], index: 5, kind: output, shape index: {}]
  %s6 = sld [smem:[#allocation0]]
  $region57: #{tpu_custom_call.1} parent=0
    _
  %s8 = ssub.s32 1, %s6
  %s9 = scalar_select 0, %s8, %s6
  $region1: #{tpu_custom_call.1} parent=0
    #allocation2 [shape = 'u8[32768]{0}', space=vmem, size = 0x8000, scoped, tag = 'input window, operand 1, single buffered']
    #allocation3 [shape = 's32[2]{0}', space=sflag, size = 0x8, scoped, tag = 'scoped memory for tpu_custom_call.1']
    #allocation4 [shape = 's32[2]{0}', space=sflag, size = 0x8, scoped, tag = 'scoped memory for tpu_custom_call.1']
    #allocation5 [shape = 'u8[8192]{0}', space=vmem, size = 0x2000, scoped, tag = 'output window, operand 0']
    %10 = vsyncpa [#allocation3], 0
    %11 = vsyncpa [#allocation4], 0
    %s12 = scalar_lea.sflag [#allocation4], 1
    %13 = vsyncpa %s12, 0
    loop: start=0, step=1, limit=5
    $region2: #{tpu_custom_call.1} parent=1 // loop_pre_header
      _
    $region3: #{tpu_custom_call.1} parent=1 // loop_header
      %s15 = sphi 0, %s19
      %p16 = scmp.ge.s32.totalorder %s15, 5
      %s25 = sphi 0, %s27
      %s28 = sphi 0, %s25
      %s29 = sphi 0, %s28
      %s45 = sphi 0, %s29
      %s49 = sphi 0, %s49
      %s51 = sphi 0, %s49
      %s52 = sphi 0, %s51
      %s66 = sphi 0, %s52
      %s70 = sphi 0, %s70
      %s72 = sphi 0, %s70
      %s73 = sphi 0, %s72
      %s87 = sphi 0, %s73
      %s91 = sphi 0, %s91
      %s93 = sphi 0, %s91
      %s94 = sphi 0, %s93
      %s108 = sphi 0, %s94
      %s114 = sphi 0, %s116
      %s117 = sphi 0, %s114
      %s118 = sphi 0, %s117
      %s134 = sphi 0, %s118
      %s140 = sphi 0, %s142
      %s143 = sphi 0, %s140
      %s144 = sphi 0, %s143
      %s160 = sphi 0, %s144
    $region4: #{tpu_custom_call.1} parent=1 // loop_header_branch
      %18 = sbr.rel (%p16) target = $region8
    $region5: #{tpu_custom_call.1} parent=1 // loop_body
      %s20 = ssub.s32 %s15, 1
      %s21 = ssub.s32 %s15, 2
      %s22 = sadd.s32 %s15, 1
      %s23 = ssub.s32 %s15, %s22
      %p24 = scmp.eq.s32.totalorder %s23, 0
      %s26 = sadd.s32 %s25, 1
      %s27 = scalar_select %p24, %s25, %s26
      %p30 = pneg %p24
      %p31 = scmp.eq.s32.totalorder %s15, 2
      %p32 = por %p30, %p31
      %p33 = scmp.ne.s32.totalorder %s25, %s28
      %p34 = scmp.eq.s32.totalorder %s15, 0
      %p35 = por %p33, %p34
      %p36 = scmp.ne.s32.totalorder %s25, %s28
      %p37 = scmp.eq.s32.totalorder %s20, 2
      %p38 = por %p36, %p37
      %p39 = scmp.ne.s32.totalorder %s28, %s29
      %p40 = scmp.eq.s32.totalorder %s20, 0
      %p41 = por %p39, %p40
      %p42 = scmp.ne.s32.totalorder %s28, %s29
      %p43 = scmp.eq.s32.totalorder %s21, 2
      %p44 = por %p42, %p43
      %p46 = scmp.ne.s32.totalorder %s29, %s45
      %p47 = scmp.eq.s32.totalorder %s21, 0
      %p48 = por %p46, %p47
      %s50 = sadd.s32 %s49, 1
      %p53 = scmp.eq.s32.totalorder %s15, 2
      %p54 = scmp.ne.s32.totalorder %s49, %s51
      %p55 = scmp.eq.s32.totalorder %s15, 0
      %p56 = por %p54, %p55
      %p57 = scmp.ne.s32.totalorder %s49, %s51
      %p58 = scmp.eq.s32.totalorder %s20, 2
      %p59 = por %p57, %p58
      %p60 = scmp.ne.s32.totalorder %s51, %s52
      %p61 = scmp.eq.s32.totalorder %s20, 0
      %p62 = por %p60, %p61
      %p63 = scmp.ne.s32.totalorder %s51, %s52
      %p64 = scmp.eq.s32.totalorder %s21, 2
      %p65 = por %p63, %p64
      %p67 = scmp.ne.s32.totalorder %s52, %s66
      %p68 = scmp.eq.s32.totalorder %s21, 0
      %p69 = por %p67, %p68
      %s71 = sadd.s32 %s70, 1
      %p74 = scmp.eq.s32.totalorder %s15, 2
      %p75 = scmp.ne.s32.totalorder %s70, %s72
      %p76 = scmp.eq.s32.totalorder %s15, 0
      %p77 = por %p75, %p76
      %p78 = scmp.ne.s32.totalorder %s70, %s72
      %p79 = scmp.eq.s32.totalorder %s20, 2
      %p80 = por %p78, %p79
      %p81 = scmp.ne.s32.totalorder %s72, %s73
      %p82 = scmp.eq.s32.totalorder %s20, 0
      %p83 = por %p81, %p82
      %p84 = scmp.ne.s32.totalorder %s72, %s73
      %p85 = scmp.eq.s32.totalorder %s21, 2
      %p86 = por %p84, %p85
      %p88 = scmp.ne.s32.totalorder %s73, %s87
      %p89 = scmp.eq.s32.totalorder %s21, 0
      %p90 = por %p88, %p89
      %s92 = sadd.s32 %s91, 1
      %p95 = scmp.eq.s32.totalorder %s15, 2
      %p96 = scmp.ne.s32.totalorder %s91, %s93
      %p97 = scmp.eq.s32.totalorder %s15, 0
      %p98 = por %p96, %p97
      %p99 = scmp.ne.s32.totalorder %s91, %s93
      %p100 = scmp.eq.s32.totalorder %s20, 2
      %p101 = por %p99, %p100
      %p102 = scmp.ne.s32.totalorder %s93, %s94
      %p103 = scmp.eq.s32.totalorder %s20, 0
      %p104 = por %p102, %p103
      %p105 = scmp.ne.s32.totalorder %s93, %s94
      %p106 = scmp.eq.s32.totalorder %s21, 2
      %p107 = por %p105, %p106
      %p109 = scmp.ne.s32.totalorder %s94, %s108
      %p110 = scmp.eq.s32.totalorder %s21, 0
      %p111 = por %p109, %p110
      %s112 = ssub.s32 %s15, %s22
      %p113 = scmp.eq.s32.totalorder %s112, 0
      %s115 = sadd.s32 %s114, 1
      %s116 = scalar_select %p113, %s114, %s115
      %p119 = pneg %p113
      %p120 = scmp.eq.s32.totalorder %s15, 2
      %p121 = por %p119, %p120
      %p122 = scmp.ne.s32.totalorder %s114, %s117
      %p123 = scmp.eq.s32.totalorder %s15, 0
      %p124 = por %p122, %p123
      %p125 = scmp.ne.s32.totalorder %s114, %s117
      %p126 = scmp.eq.s32.totalorder %s20, 2
      %p127 = por %p125, %p126
      %p128 = scmp.ne.s32.totalorder %s117, %s118
      %p129 = scmp.eq.s32.totalorder %s20, 0
      %p130 = por %p128, %p129
      %p131 = scmp.ne.s32.totalorder %s117, %s118
      %p132 = scmp.eq.s32.totalorder %s21, 2
      %p133 = por %p131, %p132
      %p135 = scmp.ne.s32.totalorder %s118, %s134
      %p136 = scmp.eq.s32.totalorder %s21, 0
      %p137 = por %p135, %p136
      %s138 = ssub.s32 %s15, %s22
      %p139 = scmp.eq.s32.totalorder %s138, 0
      %s141 = sadd.s32 %s140, 1
      %s142 = scalar_select %p139, %s140, %s141
      %p145 = pneg %p139
      %p146 = scmp.eq.s32.totalorder %s15, 2
      %p147 = por %p145, %p146
      %p148 = scmp.ne.s32.totalorder %s140, %s143
      %p149 = scmp.eq.s32.totalorder %s15, 0
      %p150 = por %p148, %p149
      %p151 = scmp.ne.s32.totalorder %s140, %s143
      %p152 = scmp.eq.s32.totalorder %s20, 2
      %p153 = por %p151, %p152
      %p154 = scmp.ne.s32.totalorder %s143, %s144
      %p155 = scmp.eq.s32.totalorder %s20, 0
      %p156 = por %p154, %p155
      %p157 = scmp.ne.s32.totalorder %s143, %s144
      %p158 = scmp.eq.s32.totalorder %s21, 2
      %p159 = por %p157, %p158
      %p161 = scmp.ne.s32.totalorder %s144, %s160
      %p162 = scmp.eq.s32.totalorder %s21, 0
      %p163 = por %p161, %p162
      %p164 = scmp.le.s32.totalorder 1, %s15
      %p165 = scmp.lt.s32.totalorder %s15, 4
      %p166 = pnand %p164, %p165
      %p167 = pneg %p166
      // Predicated region
      $region9: #{tpu_custom_call.1} parent=5 // pred_check
        _
      $region10: #{tpu_custom_call.1} parent=5 // pred_check_branch
        %169 = sbr.rel (%p166) target = $region12
      $region11: #{tpu_custom_call.1} parent=5 // pred_region
        %s170 = ssub.s32 %s15, 1
        // Predicated region
        $region13: #{tpu_custom_call.1} parent=11 // pred_check
          %p171 = pneg %p62
        $region14: #{tpu_custom_call.1} parent=11 // pred_check_branch
          %173 = sbr.rel (%p171) target = $region16
        $region15: #{tpu_custom_call.1} parent=11 // pred_region
          %175 = vsyncadd [#allocation3], 0
          %s176 = sshll.u32 %s1, 4
          %s177 = int_to_ptr.hbm [resolvable:$true] %s176
          %s178 = sshll.u32 [#allocation2], 4
          %s179 = int_to_ptr.vmem [resolvable:$true] %s178
          %184 = dma.hbm_to_vmem [thread:$0]  %s177, 1024, %s179, [#allocation3], 64, 64, 4
        $region16: #{tpu_custom_call.1} parent=11 // pred_fallthru
          _
        // Predicated region
        $region17: #{tpu_custom_call.1} parent=11 // pred_check
          %p185 = pneg %p83
        $region18: #{tpu_custom_call.1} parent=11 // pred_check_branch
          %187 = sbr.rel (%p185) target = $region20
        $region19: #{tpu_custom_call.1} parent=11 // pred_region
          _
        $region20: #{tpu_custom_call.1} parent=11 // pred_fallthru
          _
        // Predicated region
        $region21: #{tpu_custom_call.1} parent=11 // pred_check
          %p188 = pneg %p104
        $region22: #{tpu_custom_call.1} parent=11 // pred_check_branch
          %190 = sbr.rel (%p188) target = $region24
        $region23: #{tpu_custom_call.1} parent=11 // pred_region
          _
        $region24: #{tpu_custom_call.1} parent=11 // pred_fallthru
          _
      $region12: #{tpu_custom_call.1} parent=5 // pred_fallthru
        _
      %p191 = scmp.lt.s32.totalorder %s15, 3
      // Predicated region
      $region25: #{tpu_custom_call.1} parent=5 // pred_check
        %p192 = pneg %p191
      $region26: #{tpu_custom_call.1} parent=5 // pred_check_branch
        %194 = sbr.rel (%p192) target = $region28
      $region27: #{tpu_custom_call.1} parent=5 // pred_region
        // Predicated region
        $region29: #{tpu_custom_call.1} parent=27 // pred_check
          %p195 = pneg %p35
        $region30: #{tpu_custom_call.1} parent=27 // pred_check_branch
          %197 = sbr.rel (%p195) target = $region32
        $region31: #{tpu_custom_call.1} parent=27 // pred_region
          %s198 = smul.u32 2, %s15
          %p199 = scmp.lt.s32.totalorder %s198, 5
          %s200 = scalar_select %p199, %s198, 5
          %s201 = smul.addr %s200, 8
          %s202 = scalar_lea.vmem %s0, %s201
          %s203 = smul.u32 2, %s15
        $region32: #{tpu_custom_call.1} parent=27 // pred_fallthru
          _
        // Predicated region
        $region33: #{tpu_custom_call.1} parent=27 // pred_check
          %p204 = pneg %p124
        $region34: #{tpu_custom_call.1} parent=27 // pred_check_branch
          %206 = sbr.rel (%p204) target = $region36
        $region35: #{tpu_custom_call.1} parent=27 // pred_region
          %s207 = smul.u32 2, %s15
          %p208 = scmp.lt.s32.totalorder %s207, 5
          %s209 = scalar_select %p208, %s207, 5
          %s210 = smul.addr %s209, 8
          %s211 = scalar_lea.vmem %s4, %s210
          %s212 = smul.u32 2, %s15
        $region36: #{tpu_custom_call.1} parent=27 // pred_fallthru
          _
      $region28: #{tpu_custom_call.1} parent=5 // pred_fallthru
        _
      %p213 = scmp.le.s32.totalorder 1, %s15
      %p214 = scmp.lt.s32.totalorder %s15, 4
      %p215 = pnand %p213, %p214
      %p216 = pneg %p215
      // Predicated region
      $region37: #{tpu_custom_call.1} parent=5 // pred_check
        _
      $region38: #{tpu_custom_call.1} parent=5 // pred_check_branch
        %218 = sbr.rel (%p215) target = $region40
      $region39: #{tpu_custom_call.1} parent=5 // pred_region
        %s219 = ssub.s32 %s15, 1
        // Predicated region
        $region41: #{tpu_custom_call.1} parent=39 // pred_check
          %p220 = pneg %p62
        $region42: #{tpu_custom_call.1} parent=39 // pred_check_branch
          %222 = sbr.rel (%p220) target = $region44
        $region43: #{tpu_custom_call.1} parent=39 // pred_region
          %224 = dma.done [#allocation3], 1024
        $region44: #{tpu_custom_call.1} parent=39 // pred_fallthru
          _
        %s225 = smul.u32 2, %s20
        %p226 = scmp.lt.s32.totalorder %s225, 5
        %s227 = scalar_select %p226, %s225, 5
        %s228 = smul.addr %s227, 8
        %s229 = scalar_lea.vmem %s0, %s228
        %p230 = pneg %p41
        %p231 = pneg %p38
        %p232 = pneg %p62
        %p233 = pneg %p59
        %p234 = pneg %p83
        %p235 = pneg %p80
        %p236 = pneg %p104
        %p237 = pneg %p101
        %s238 = smul.u32 2, %s20
        %p239 = scmp.lt.s32.totalorder %s238, 5
        %s240 = scalar_select %p239, %s238, 5
        %s241 = smul.addr %s240, 8
        %s242 = scalar_lea.vmem %s4, %s241
        %p243 = pneg %p130
        %p244 = pneg %p127
        %p245 = pneg %p156
        %p246 = pneg %p153
        %s247 = sand.u32 %s143, 1
        %s248 = scalar_lea.sflag [#allocation4], %s247
        %s249 = sand.u32 %s143, 1
        %s250 = smul.addr %s249, 8
        %s251 = scalar_lea.vmem [#allocation5], %s250
        %s252 = smul.u32 2, %s20
        %p253 = scmp.lt.s32.totalorder %s252, 5
        %s254 = scalar_select %p253, %s252, 5
        %s255 = smul.addr %s254, 8
        %s256 = scalar_lea.vmem %s0, %s255
        %s257 = smul.u32 2, %s20
        %s258 = smul.u32 2, %s20
        %p259 = scmp.lt.s32.totalorder %s258, 5
        %s260 = scalar_select %p259, %s258, 5
        %s261 = smul.addr %s260, 8
        %s262 = scalar_lea.vmem %s4, %s261
        %s263 = smul.u32 2, %s20
        %v264 = vld [vmem:[%s256] sm:$0xff]
        %v265 = vld [vmem:[%s256 + $0x8] sm:$0xff]
        %v266 = vpack.c.bf16 %v265, %v264
        %v267 = vld [vmem:[#allocation2] sm:$0xf]
        %v268 = vld [vmem:[#allocation2 + $0x4] sm:$0xf]
        %v269 = vld [vmem:[#allocation2 + $0x8] sm:$0xf]
        %v270 = vld [vmem:[#allocation2 + $0xc] sm:$0xf]
        %v271 = vld [vmem:[#allocation2 + $0x10] sm:$0xf]
        %v272 = vld [vmem:[#allocation2 + $0x14] sm:$0xf]
        %v273 = vld [vmem:[#allocation2 + $0x18] sm:$0xf]
        %v274 = vld [vmem:[#allocation2 + $0x1c] sm:$0xf]
        %v275 = vld [vmem:[#allocation2 + $0x20] sm:$0xf]
        %v276 = vld [vmem:[#allocation2 + $0x24] sm:$0xf]
        %v277 = vld [vmem:[#allocation2 + $0x28] sm:$0xf]
        %v278 = vld [vmem:[#allocation2 + $0x2c] sm:$0xf]
        %v279 = vld [vmem:[#allocation2 + $0x30] sm:$0xf]
        %v280 = vld [vmem:[#allocation2 + $0x34] sm:$0xf]
        %v281 = vld [vmem:[#allocation2 + $0x38] sm:$0xf]
        %v282 = vld [vmem:[#allocation2 + $0x3c] sm:$0xf]
        %v283 = vld [vmem:[%s2] sm:$0x1]
        %v285 = vperm.slane %v283, 0
        %v303 = vunpack.c.l.b16 %v267
        %v304 = vunpack.c.l.b16 %v268
        %v305 = vunpack.c.l.b16 %v269
        %v306 = vunpack.c.l.b16 %v270
        %v307 = vunpack.c.l.b16 %v271
        %v308 = vunpack.c.l.b16 %v272
        %v309 = vunpack.c.l.b16 %v273
        %v310 = vunpack.c.l.b16 %v274
        %v311 = vunpack.c.l.b16 %v275
        %v312 = vunpack.c.l.b16 %v276
        %v313 = vunpack.c.l.b16 %v277
        %v314 = vunpack.c.l.b16 %v278
        %v315 = vunpack.c.l.b16 %v279
        %v316 = vunpack.c.l.b16 %v280
        %v317 = vunpack.c.l.b16 %v281
        %v318 = vunpack.c.l.b16 %v282
        %v319 = vpack.c.b16 %v304, %v303
        %v320 = vpack.c.b16 %v306, %v305
        %v321 = vpack.c.b16 %v308, %v307
        %v322 = vpack.c.b16 %v310, %v309
        %v323 = vpack.c.b16 %v312, %v311
        %v324 = vpack.c.b16 %v314, %v313
        %v325 = vpack.c.b16 %v316, %v315
        %v326 = vpack.c.b16 %v318, %v317
        %335 = vmatpush.bf16.msra.mxu0 %v326
        %336 = vmatpush.bf16.msra.mxu0 %v325
        %337 = vmatpush.bf16.msra.mxu0 %v324
        %338 = vmatpush.bf16.msra.mxu0 %v323
        %339 = vmatpush.bf16.msra.mxu0 %v322
        %340 = vmatpush.bf16.msra.mxu0 %v321
        %341 = vmatpush.bf16.msra.mxu0 %v320
        %342 = vmatpush.bf16.msra.mxu0 %v319
        %343 = vmatmul.bf16.gmra.mxu0 %v266
        %v344 = vpop.f32.mrf.mxu0
        %v345 = vadd.f32 %v285, %v344
        %v346 = vpop.f32.mrf.mxu0
        %v347 = vadd.f32 %v285, %v346
        %348 = vdwg.mxu0
        %349 = vmax.xlane.f32.xlu0 %v345
        %v350 = vpop.xlane.xlu0 %349
        %351 = vmax.xlane.f32.xlu0 %v347
        %v352 = vpop.xlane.xlu0 %351
        %v353 = vsub.f32 %v345, %v350
        %v354 = vsub.f32 %v347, %v352
        %v355 = vmul.f32 %v353, 1.442695
        %v356 = vpow.pop %v355
        %v357 = vmul.f32 %v354, 1.442695
        %v358 = vpow.pop %v357
        %v359 = vld [vmem:[%s3] sm:$0x1]
        %v360 = vsub.f32 1.0, %v359
        %v362 = vperm.slane %v360, 0
        %v364 = vmul.f32 %v362, %v356
        %v365 = vmul.f32 %v362, %v358
        %366 = vadd.xlane.f32.xlu0 %v364
        %v367 = vpop.xlane.xlu0 %366
        %368 = vadd.xlane.f32.xlu0 %v365
        %v369 = vpop.xlane.xlu0 %368
        %v370 = vld [vmem:[%s262] sm:$0xff]
        %v371 = vld [vmem:[%s262 + $0x8] sm:$0xff]
        %vm372 = vcmp.gt.s32.totalorder %v370, 0
        %vm373 = vcmp.gt.s32.totalorder %v371, 0
        %v374 = vlaneseq
        %v375 = vand.u32 %v374, 127
        %376 = vset.pattern.permute.xlu0 0
        %377 = vperm.xlu0 %376, %v370
        %v378 = vpop.permute.xlu0 %377
        %379 = vset.pattern.permute.xlu0 0
        %380 = vperm.xlu0 %379, %v371
        %v381 = vpop.permute.xlu0 %380
        %vm382 = vcmp.eq.s32.totalorder %v375, %v378
        %vm383 = vcmp.eq.s32.totalorder %v375, %v381
        %384 = vset.pattern.permute.xlu0 1
        %385 = vperm.xlu0 %384, %v370
        %v386 = vpop.permute.xlu0 %385
        %387 = vset.pattern.permute.xlu0 1
        %388 = vperm.xlu0 %387, %v371
        %v389 = vpop.permute.xlu0 %388
        %vm390 = vcmp.eq.s32.totalorder %v375, %v386
        %vm391 = vcmp.eq.s32.totalorder %v375, %v389
        %v392 = vsel %vm382, %v345, 0.0
        %v393 = vsel %vm383, %v347, 0.0
        %394 = vadd.xlane.f32.xlu0 %v392
        %v395 = vpop.xlane.xlu0 %394
        %396 = vadd.xlane.f32.xlu0 %v393
        %v397 = vpop.xlane.xlu0 %396
        %v398 = vsub.f32 %v395, %v350
        %v399 = vsub.f32 %v397, %v352
        %v400 = vsel %vm390, %v345, 0.0
        %v401 = vsel %vm391, %v347, 0.0
        %402 = vadd.xlane.f32.xlu0 %v400
        %v403 = vpop.xlane.xlu0 %402
        %404 = vadd.xlane.f32.xlu0 %v401
        %v405 = vpop.xlane.xlu0 %404
        %v406 = vsub.f32 %v403, %v350
        %v407 = vsub.f32 %v405, %v352
        %v409 = vperm.slane %v359, 0
        %v411 = vsel %vm382, %v409, 0.0
        %v412 = vsel %vm383, %v409, 0.0
        %413 = vadd.xlane.f32.xlu0 %v411
        %v414 = vpop.xlane.xlu0 %413
        %415 = vadd.xlane.f32.xlu0 %v412
        %v416 = vpop.xlane.xlu0 %415
        %v417 = vsel %vm390, %v409, 0.0
        %v418 = vsel %vm391, %v409, 0.0
        %419 = vadd.xlane.f32.xlu0 %v417
        %v420 = vpop.xlane.xlu0 %419
        %421 = vadd.xlane.f32.xlu0 %v418
        %v422 = vpop.xlane.xlu0 %421
        %v423 = vmul.f32 %v398, 1.442695
        %v424 = vpow.pop %v423
        %v425 = vmul.f32 %v399, 1.442695
        %v426 = vpow.pop %v425
        %v427 = vmul.f32 %v414, %v424
        %v428 = vmul.f32 %v416, %v426
        %v429 = vadd.f32 %v367, %v427
        %v430 = vadd.f32 %v369, %v428
        %v431 = vmax.f32 %v429, 1e-30
        %v432 = vmax.f32 %v430, 1e-30
        %v433 = vmul.f32 %v406, 1.442695
        %v434 = vpow.pop %v433
        %v435 = vmul.f32 %v407, 1.442695
        %v436 = vpow.pop %v435
        %v437 = vmul.f32 %v420, %v434
        %v438 = vmul.f32 %v422, %v436
        %v439 = vadd.f32 %v367, %v437
        %v440 = vadd.f32 %v369, %v438
        %v441 = vmax.f32 %v439, 1e-30
        %v442 = vmax.f32 %v440, 1e-30
        %v443 = vlog2.pop %v431
        %v444 = vmul.f32 %v443, 0.6931472
        %v445 = vlog2.pop %v432
        %v446 = vmul.f32 %v445, 0.6931472
        %v447 = vsub.f32 %v398, %v444
        %v448 = vsub.f32 %v399, %v446
        %v449 = vlog2.pop %v441
        %v450 = vmul.f32 %v449, 0.6931472
        %v451 = vlog2.pop %v442
        %v452 = vmul.f32 %v451, 0.6931472
        %v453 = vsub.f32 %v406, %v450
        %v454 = vsub.f32 %v407, %v452
        %v455 = vsel %vm372, %v447, 0.0
        %v456 = vsel %vm373, %v448, 0.0
        %459 = vrot.lane.b32.xlu0 %v455, 126
        %v460 = vpop.permute.xlu0 %459
        %461 = vrot.lane.b32.xlu0 %v456, 126
        %v462 = vpop.permute.xlu0 %461
        %vm465 = vcmask 7168
        %v466 = vsel %vm465, %v460, 0.0
        %v467 = vsel %vm465, %v462, 0.0
        %v468 = vadd.f32 %v466, %v467
        %469 = vadd.xlane.f32.xlu0 %v468
        %v470 = vpop.xlane.xlu0 %469
        %v471 = vrot.slane %v470, 4
        %v472 = vadd.f32 %v470, %v471
        %v473 = vrot.slane %v472, 2
        %v474 = vadd.f32 %v472, %v473
        %v475 = vrot.slane %v474, 1
        %v476 = vadd.f32 %v474, %v475
        %s477 = vtos %v476
        %v478 = vsel %vm372, %v453, 0.0
        %v479 = vsel %vm373, %v454, 0.0
        %482 = vrot.lane.b32.xlu0 %v478, 126
        %v483 = vpop.permute.xlu0 %482
        %484 = vrot.lane.b32.xlu0 %v479, 126
        %v485 = vpop.permute.xlu0 %484
        %v488 = vsel %vm465, %v483, 0.0
        %v489 = vsel %vm465, %v485, 0.0
        %v490 = vadd.f32 %v488, %v489
        %491 = vadd.xlane.f32.xlu0 %v490
        %v492 = vpop.xlane.xlu0 %491
        %v493 = vrot.slane %v492, 4
        %v494 = vadd.f32 %v492, %v493
        %v495 = vrot.slane %v494, 2
        %v496 = vadd.f32 %v494, %v495
        %v497 = vrot.slane %v496, 1
        %v498 = vadd.f32 %v496, %v497
        %s499 = vtos %v498
        %vm500 = vcmp.eq.s32.totalorder %v375, 0
        %vm501 = vcmp.eq.s32.totalorder %v375, 1
        %v502 = vstv %s499
        %v503 = vsel %vm501, %v502, 0.0
        %v504 = vstv %s477
        %v505 = vsel %vm500, %v504, %v503
        %506 = vst [vmem:[%s251] sm:$0xff] %v505
        %s507 = sand.u32 %s143, 1
        %s508 = scalar_lea.sflag [#allocation4], %s507
        %s509 = sand.u32 %s143, 1
        %s510 = smul.addr %s509, 8
        %s511 = scalar_lea.vmem [#allocation5], %s510
        // Predicated region
        $region45: #{tpu_custom_call.1} parent=39 // pred_check
          %p512 = pneg %p153
        $region46: #{tpu_custom_call.1} parent=39 // pred_check_branch
          %514 = sbr.rel (%p512) target = $region48
        $region47: #{tpu_custom_call.1} parent=39 // pred_region
          %516 = vsyncadd %s508, 0
          %s517 = smul.addr %s20, 8
          %s518 = scalar_lea.hbm %s5, %s517
          %s520 = sshll.u32 %s511, 4
          %s521 = int_to_ptr.vmem [resolvable:$true] %s520
          %s522 = sshll.u32 %s518, 4
          %s523 = int_to_ptr.hbm [resolvable:$true] %s522
          %525 = dma.vmem_to_hbm [thread:$0]  %s521, 128, %s523, %s508
        $region48: #{tpu_custom_call.1} parent=39 // pred_fallthru
          _
      $region40: #{tpu_custom_call.1} parent=5 // pred_fallthru
        _
      %p526 = scmp.le.s32.totalorder 2, %s15
      // Predicated region
      $region49: #{tpu_custom_call.1} parent=5 // pred_check
        %p527 = pneg %p526
      $region50: #{tpu_custom_call.1} parent=5 // pred_check_branch
        %529 = sbr.rel (%p527) target = $region52
      $region51: #{tpu_custom_call.1} parent=5 // pred_region
        %s530 = ssub.s32 %s15, 2
        // Predicated region
        $region53: #{tpu_custom_call.1} parent=51 // pred_check
          %p531 = pneg %p159
        $region54: #{tpu_custom_call.1} parent=51 // pred_check_branch
          %533 = sbr.rel (%p531) target = $region56
        $region55: #{tpu_custom_call.1} parent=51 // pred_region
          %s534 = sand.u32 %s144, 1
          %s535 = scalar_lea.sflag [#allocation4], %s534
          %s536 = sand.u32 %s144, 1
          %s537 = smul.addr %s536, 8
          %s538 = scalar_lea.vmem [#allocation5], %s537
          %540 = dma.done %s535, 128
        $region56: #{tpu_custom_call.1} parent=51 // pred_fallthru
          _
      $region52: #{tpu_custom_call.1} parent=5 // pred_fallthru
        _
    $region6: #{tpu_custom_call.1} parent=1 // loop_footer
      %s19 = sadd.s32 1, %s15
    $region7: #{tpu_custom_call.1} parent=1 // loop_footer_branch
      %14 = sbr.rel target = $region3
    $region8: #{tpu_custom_call.1} parent=1 // loop_exit
      _
    %541 = vsyncpa [#allocation3], 1
    %s542 = scalar_lea.sflag [#allocation3], 1
    %543 = vsyncpa %s542, 1
    %544 = vsyncpa [#allocation4], 1
    %s545 = scalar_lea.sflag [#allocation4], 1
    %546 = vsyncpa %s545, 1

// kernel: tpu_custom_call.1
$region0: #{tpu_custom_call.1}
  #allocation0 [shape = 'u32[]', space=smem, size = 0x4, offset = 0x4, fixed_abs, tag = 'smem constant byte address 0x4 - core index']
  #allocation1 [shape = 'u32[72,128]{1,0:T(1,128)}', space=vmem, size = 0x9000, scoped, tag = 'internal scratch']
  %s0 = inlined_call_operand.vmem [shape: f32[48,128], index: 0, kind: input, shape index: {}]
  %s1 = inlined_call_operand.hbm [shape: bf16[128,128], index: 1, kind: input, shape index: {}]
  %s2 = inlined_call_operand.vmem [shape: f32[1,128], index: 2, kind: input, shape index: {}]
  %s3 = inlined_call_operand.vmem [shape: f32[1,128], index: 3, kind: input, shape index: {}]
  %s4 = inlined_call_operand.vmem [shape: s32[48,3], index: 4, kind: input, shape index: {}]
  %s5 = inlined_call_operand.hbm [shape: f32[24,128], index: 5, kind: output, shape index: {}]
  %s6 = sld [smem:[#allocation0]]
  $region57: #{tpu_custom_call.1} parent=0
    _
  %s8 = ssub.s32 1, %s6
  %s9 = scalar_select 0, %s8, %s6
  $region1: #{tpu_custom_call.1} parent=0
    #allocation2 [shape = 'u8[32768]{0}', space=vmem, size = 0x8000, scoped, tag = 'input window, operand 1, single buffered']
    #allocation3 [shape = 's32[2]{0}', space=sflag, size = 0x8, scoped, tag = 'scoped memory for tpu_custom_call.1']
    #allocation4 [shape = 's32[2]{0}', space=sflag, size = 0x8, scoped, tag = 'scoped memory for tpu_custom_call.1']
    #allocation5 [shape = 'u8[8192]{0}', space=vmem, size = 0x2000, scoped, tag = 'output window, operand 0']
    %10 = vsyncpa [#allocation3], 0
    %11 = vsyncpa [#allocation4], 0
    %s12 = scalar_lea.sflag [#allocation4], 1
    %13 = vsyncpa %s12, 0
    loop: start=0, step=1, limit=5
    $region2: #{tpu_custom_call.1} parent=1 // loop_pre_header
      _
    $region3: #{tpu_custom_call.1} parent=1 // loop_header
      %s15 = sphi 0, %s19
      %p16 = scmp.ge.s32.totalorder %s15, 5
      %s25 = sphi 0, %s27
      %s28 = sphi 0, %s25
      %s29 = sphi 0, %s28
      %s45 = sphi 0, %s29
      %s49 = sphi 0, %s49
      %s51 = sphi 0, %s49
      %s52 = sphi 0, %s51
      %s66 = sphi 0, %s52
      %s70 = sphi 0, %s70
      %s72 = sphi 0, %s70
      %s73 = sphi 0, %s72
      %s87 = sphi 0, %s73
      %s91 = sphi 0, %s91
      %s93 = sphi 0, %s91
      %s94 = sphi 0, %s93
      %s108 = sphi 0, %s94
      %s114 = sphi 0, %s116
      %s117 = sphi 0, %s114
      %s118 = sphi 0, %s117
      %s134 = sphi 0, %s118
      %s140 = sphi 0, %s142
      %s143 = sphi 0, %s140
      %s144 = sphi 0, %s143
      %s160 = sphi 0, %s144
    $region4: #{tpu_custom_call.1} parent=1 // loop_header_branch
      %18 = sbr.rel (%p16) target = $region8
    $region5: #{tpu_custom_call.1} parent=1 // loop_body
      %s20 = ssub.s32 %s15, 1
      %s21 = ssub.s32 %s15, 2
      %s22 = sadd.s32 %s15, 1
      %s23 = ssub.s32 %s15, %s22
      %p24 = scmp.eq.s32.totalorder %s23, 0
      %s26 = sadd.s32 %s25, 1
      %s27 = scalar_select %p24, %s25, %s26
      %p30 = pneg %p24
      %p31 = scmp.eq.s32.totalorder %s15, 2
      %p32 = por %p30, %p31
      %p33 = scmp.ne.s32.totalorder %s25, %s28
      %p34 = scmp.eq.s32.totalorder %s15, 0
      %p35 = por %p33, %p34
      %p36 = scmp.ne.s32.totalorder %s25, %s28
      %p37 = scmp.eq.s32.totalorder %s20, 2
      %p38 = por %p36, %p37
      %p39 = scmp.ne.s32.totalorder %s28, %s29
      %p40 = scmp.eq.s32.totalorder %s20, 0
      %p41 = por %p39, %p40
      %p42 = scmp.ne.s32.totalorder %s28, %s29
      %p43 = scmp.eq.s32.totalorder %s21, 2
      %p44 = por %p42, %p43
      %p46 = scmp.ne.s32.totalorder %s29, %s45
      %p47 = scmp.eq.s32.totalorder %s21, 0
      %p48 = por %p46, %p47
      %s50 = sadd.s32 %s49, 1
      %p53 = scmp.eq.s32.totalorder %s15, 2
      %p54 = scmp.ne.s32.totalorder %s49, %s51
      %p55 = scmp.eq.s32.totalorder %s15, 0
      %p56 = por %p54, %p55
      %p57 = scmp.ne.s32.totalorder %s49, %s51
      %p58 = scmp.eq.s32.totalorder %s20, 2
      %p59 = por %p57, %p58
      %p60 = scmp.ne.s32.totalorder %s51, %s52
      %p61 = scmp.eq.s32.totalorder %s20, 0
      %p62 = por %p60, %p61
      %p63 = scmp.ne.s32.totalorder %s51, %s52
      %p64 = scmp.eq.s32.totalorder %s21, 2
      %p65 = por %p63, %p64
      %p67 = scmp.ne.s32.totalorder %s52, %s66
      %p68 = scmp.eq.s32.totalorder %s21, 0
      %p69 = por %p67, %p68
      %s71 = sadd.s32 %s70, 1
      %p74 = scmp.eq.s32.totalorder %s15, 2
      %p75 = scmp.ne.s32.totalorder %s70, %s72
      %p76 = scmp.eq.s32.totalorder %s15, 0
      %p77 = por %p75, %p76
      %p78 = scmp.ne.s32.totalorder %s70, %s72
      %p79 = scmp.eq.s32.totalorder %s20, 2
      %p80 = por %p78, %p79
      %p81 = scmp.ne.s32.totalorder %s72, %s73
      %p82 = scmp.eq.s32.totalorder %s20, 0
      %p83 = por %p81, %p82
      %p84 = scmp.ne.s32.totalorder %s72, %s73
      %p85 = scmp.eq.s32.totalorder %s21, 2
      %p86 = por %p84, %p85
      %p88 = scmp.ne.s32.totalorder %s73, %s87
      %p89 = scmp.eq.s32.totalorder %s21, 0
      %p90 = por %p88, %p89
      %s92 = sadd.s32 %s91, 1
      %p95 = scmp.eq.s32.totalorder %s15, 2
      %p96 = scmp.ne.s32.totalorder %s91, %s93
      %p97 = scmp.eq.s32.totalorder %s15, 0
      %p98 = por %p96, %p97
      %p99 = scmp.ne.s32.totalorder %s91, %s93
      %p100 = scmp.eq.s32.totalorder %s20, 2
      %p101 = por %p99, %p100
      %p102 = scmp.ne.s32.totalorder %s93, %s94
      %p103 = scmp.eq.s32.totalorder %s20, 0
      %p104 = por %p102, %p103
      %p105 = scmp.ne.s32.totalorder %s93, %s94
      %p106 = scmp.eq.s32.totalorder %s21, 2
      %p107 = por %p105, %p106
      %p109 = scmp.ne.s32.totalorder %s94, %s108
      %p110 = scmp.eq.s32.totalorder %s21, 0
      %p111 = por %p109, %p110
      %s112 = ssub.s32 %s15, %s22
      %p113 = scmp.eq.s32.totalorder %s112, 0
      %s115 = sadd.s32 %s114, 1
      %s116 = scalar_select %p113, %s114, %s115
      %p119 = pneg %p113
      %p120 = scmp.eq.s32.totalorder %s15, 2
      %p121 = por %p119, %p120
      %p122 = scmp.ne.s32.totalorder %s114, %s117
      %p123 = scmp.eq.s32.totalorder %s15, 0
      %p124 = por %p122, %p123
      %p125 = scmp.ne.s32.totalorder %s114, %s117
      %p126 = scmp.eq.s32.totalorder %s20, 2
      %p127 = por %p125, %p126
      %p128 = scmp.ne.s32.totalorder %s117, %s118
      %p129 = scmp.eq.s32.totalorder %s20, 0
      %p130 = por %p128, %p129
      %p131 = scmp.ne.s32.totalorder %s117, %s118
      %p132 = scmp.eq.s32.totalorder %s21, 2
      %p133 = por %p131, %p132
      %p135 = scmp.ne.s32.totalorder %s118, %s134
      %p136 = scmp.eq.s32.totalorder %s21, 0
      %p137 = por %p135, %p136
      %s138 = ssub.s32 %s15, %s22
      %p139 = scmp.eq.s32.totalorder %s138, 0
      %s141 = sadd.s32 %s140, 1
      %s142 = scalar_select %p139, %s140, %s141
      %p145 = pneg %p139
      %p146 = scmp.eq.s32.totalorder %s15, 2
      %p147 = por %p145, %p146
      %p148 = scmp.ne.s32.totalorder %s140, %s143
      %p149 = scmp.eq.s32.totalorder %s15, 0
      %p150 = por %p148, %p149
      %p151 = scmp.ne.s32.totalorder %s140, %s143
      %p152 = scmp.eq.s32.totalorder %s20, 2
      %p153 = por %p151, %p152
      %p154 = scmp.ne.s32.totalorder %s143, %s144
      %p155 = scmp.eq.s32.totalorder %s20, 0
      %p156 = por %p154, %p155
      %p157 = scmp.ne.s32.totalorder %s143, %s144
      %p158 = scmp.eq.s32.totalorder %s21, 2
      %p159 = por %p157, %p158
      %p161 = scmp.ne.s32.totalorder %s144, %s160
      %p162 = scmp.eq.s32.totalorder %s21, 0
      %p163 = por %p161, %p162
      %p164 = scmp.le.s32.totalorder 1, %s15
      %p165 = scmp.lt.s32.totalorder %s15, 4
      %p166 = pnand %p164, %p165
      %p167 = pneg %p166
      // Predicated region
      $region9: #{tpu_custom_call.1} parent=5 // pred_check
        _
      $region10: #{tpu_custom_call.1} parent=5 // pred_check_branch
        %169 = sbr.rel (%p166) target = $region12
      $region11: #{tpu_custom_call.1} parent=5 // pred_region
        %s170 = ssub.s32 %s15, 1
        // Predicated region
        $region13: #{tpu_custom_call.1} parent=11 // pred_check
          %p171 = pneg %p62
        $region14: #{tpu_custom_call.1} parent=11 // pred_check_branch
          %173 = sbr.rel (%p171) target = $region16
        $region15: #{tpu_custom_call.1} parent=11 // pred_region
          %175 = vsyncadd [#allocation3], 0
          %s176 = sshll.u32 %s1, 4
          %s177 = int_to_ptr.hbm [resolvable:$true] %s176
          %s178 = sshll.u32 [#allocation2], 4
          %s179 = int_to_ptr.vmem [resolvable:$true] %s178
          %184 = dma.hbm_to_vmem [thread:$0]  %s177, 1024, %s179, [#allocation3], 64, 64, 4
        $region16: #{tpu_custom_call.1} parent=11 // pred_fallthru
          _
        // Predicated region
        $region17: #{tpu_custom_call.1} parent=11 // pred_check
          %p185 = pneg %p83
        $region18: #{tpu_custom_call.1} parent=11 // pred_check_branch
          %187 = sbr.rel (%p185) target = $region20
        $region19: #{tpu_custom_call.1} parent=11 // pred_region
          _
        $region20: #{tpu_custom_call.1} parent=11 // pred_fallthru
          _
        // Predicated region
        $region21: #{tpu_custom_call.1} parent=11 // pred_check
          %p188 = pneg %p104
        $region22: #{tpu_custom_call.1} parent=11 // pred_check_branch
          %190 = sbr.rel (%p188) target = $region24
        $region23: #{tpu_custom_call.1} parent=11 // pred_region
          _
        $region24: #{tpu_custom_call.1} parent=11 // pred_fallthru
          _
      $region12: #{tpu_custom_call.1} parent=5 // pred_fallthru
        _
      %p191 = scmp.lt.s32.totalorder %s15, 3
      // Predicated region
      $region25: #{tpu_custom_call.1} parent=5 // pred_check
        %p192 = pneg %p191
      $region26: #{tpu_custom_call.1} parent=5 // pred_check_branch
        %194 = sbr.rel (%p192) target = $region28
      $region27: #{tpu_custom_call.1} parent=5 // pred_region
        // Predicated region
        $region29: #{tpu_custom_call.1} parent=27 // pred_check
          %p195 = pneg %p35
        $region30: #{tpu_custom_call.1} parent=27 // pred_check_branch
          %197 = sbr.rel (%p195) target = $region32
        $region31: #{tpu_custom_call.1} parent=27 // pred_region
          %s198 = smul.u32 2, %s15
          %p199 = scmp.lt.s32.totalorder %s198, 5
          %s200 = scalar_select %p199, %s198, 5
          %s201 = smul.addr %s200, 8
          %s202 = scalar_lea.vmem %s0, %s201
          %s203 = smul.u32 2, %s15
        $region32: #{tpu_custom_call.1} parent=27 // pred_fallthru
          _
        // Predicated region
        $region33: #{tpu_custom_call.1} parent=27 // pred_check
          %p204 = pneg %p124
        $region34: #{tpu_custom_call.1} parent=27 // pred_check_branch
          %206 = sbr.rel (%p204) target = $region36
        $region35: #{tpu_custom_call.1} parent=27 // pred_region
          %s207 = smul.u32 2, %s15
          %p208 = scmp.lt.s32.totalorder %s207, 5
          %s209 = scalar_select %p208, %s207, 5
          %s210 = smul.addr %s209, 8
          %s211 = scalar_lea.vmem %s4, %s210
          %s212 = smul.u32 2, %s15
        $region36: #{tpu_custom_call.1} parent=27 // pred_fallthru
          _
      $region28: #{tpu_custom_call.1} parent=5 // pred_fallthru
        _
      %p213 = scmp.le.s32.totalorder 1, %s15
      %p214 = scmp.lt.s32.totalorder %s15, 4
      %p215 = pnand %p213, %p214
      %p216 = pneg %p215
      // Predicated region
      $region37: #{tpu_custom_call.1} parent=5 // pred_check
        _
      $region38: #{tpu_custom_call.1} parent=5 // pred_check_branch
        %218 = sbr.rel (%p215) target = $region40
      $region39: #{tpu_custom_call.1} parent=5 // pred_region
        %s219 = ssub.s32 %s15, 1
        // Predicated region
        $region41: #{tpu_custom_call.1} parent=39 // pred_check
          %p220 = pneg %p62
        $region42: #{tpu_custom_call.1} parent=39 // pred_check_branch
          %222 = sbr.rel (%p220) target = $region44
        $region43: #{tpu_custom_call.1} parent=39 // pred_region
          %224 = dma.done [#allocation3], 1024
        $region44: #{tpu_custom_call.1} parent=39 // pred_fallthru
          _
        %s225 = smul.u32 2, %s20
        %p226 = scmp.lt.s32.totalorder %s225, 5
        %s227 = scalar_select %p226, %s225, 5
        %s228 = smul.addr %s227, 8
        %s229 = scalar_lea.vmem %s0, %s228
        %p230 = pneg %p41
        %p231 = pneg %p38
        %p232 = pneg %p62
        %p233 = pneg %p59
        %p234 = pneg %p83
        %p235 = pneg %p80
        %p236 = pneg %p104
        %p237 = pneg %p101
        %s238 = smul.u32 2, %s20
        %p239 = scmp.lt.s32.totalorder %s238, 5
        %s240 = scalar_select %p239, %s238, 5
        %s241 = smul.addr %s240, 8
        %s242 = scalar_lea.vmem %s4, %s241
        %p243 = pneg %p130
        %p244 = pneg %p127
        %p245 = pneg %p156
        %p246 = pneg %p153
        %s247 = sand.u32 %s143, 1
        %s248 = scalar_lea.sflag [#allocation4], %s247
        %s249 = sand.u32 %s143, 1
        %s250 = smul.addr %s249, 8
        %s251 = scalar_lea.vmem [#allocation5], %s250
        %s252 = smul.u32 2, %s20
        %p253 = scmp.lt.s32.totalorder %s252, 5
        %s254 = scalar_select %p253, %s252, 5
        %s255 = smul.addr %s254, 8
        %s256 = scalar_lea.vmem %s0, %s255
        %s257 = smul.u32 2, %s20
        %s258 = smul.u32 2, %s20
        %p259 = scmp.lt.s32.totalorder %s258, 5
        %s260 = scalar_select %p259, %s258, 5
        %s261 = smul.addr %s260, 8
        %s262 = scalar_lea.vmem %s4, %s261
        %s263 = smul.u32 2, %s20
        %v264 = vld [vmem:[%s256] sm:$0xff]
        %v265 = vld [vmem:[%s256 + $0x8] sm:$0xff]
        %v266 = vpack.c.bf16 %v265, %v264
        %v267 = vld [vmem:[#allocation2] sm:$0xf]
        %v268 = vld [vmem:[#allocation2 + $0x4] sm:$0xf]
        %v269 = vld [vmem:[#allocation2 + $0x8] sm:$0xf]
        %v270 = vld [vmem:[#allocation2 + $0xc] sm:$0xf]
        %v271 = vld [vmem:[#allocation2 + $0x10] sm:$0xf]
        %v272 = vld [vmem:[#allocation2 + $0x14] sm:$0xf]
        %v273 = vld [vmem:[#allocation2 + $0x18] sm:$0xf]
        %v274 = vld [vmem:[#allocation2 + $0x1c] sm:$0xf]
        %v275 = vld [vmem:[#allocation2 + $0x20] sm:$0xf]
        %v276 = vld [vmem:[#allocation2 + $0x24] sm:$0xf]
        %v277 = vld [vmem:[#allocation2 + $0x28] sm:$0xf]
        %v278 = vld [vmem:[#allocation2 + $0x2c] sm:$0xf]
        %v279 = vld [vmem:[#allocation2 + $0x30] sm:$0xf]
        %v280 = vld [vmem:[#allocation2 + $0x34] sm:$0xf]
        %v281 = vld [vmem:[#allocation2 + $0x38] sm:$0xf]
        %v282 = vld [vmem:[#allocation2 + $0x3c] sm:$0xf]
        %v283 = vld [vmem:[%s2] sm:$0x1]
        %v285 = vperm.slane %v283, 0
        %v303 = vunpack.c.l.b16 %v267
        %v304 = vunpack.c.l.b16 %v268
        %v305 = vunpack.c.l.b16 %v269
        %v306 = vunpack.c.l.b16 %v270
        %v307 = vunpack.c.l.b16 %v271
        %v308 = vunpack.c.l.b16 %v272
        %v309 = vunpack.c.l.b16 %v273
        %v310 = vunpack.c.l.b16 %v274
        %v311 = vunpack.c.l.b16 %v275
        %v312 = vunpack.c.l.b16 %v276
        %v313 = vunpack.c.l.b16 %v277
        %v314 = vunpack.c.l.b16 %v278
        %v315 = vunpack.c.l.b16 %v279
        %v316 = vunpack.c.l.b16 %v280
        %v317 = vunpack.c.l.b16 %v281
        %v318 = vunpack.c.l.b16 %v282
        %v319 = vpack.c.b16 %v304, %v303
        %v320 = vpack.c.b16 %v306, %v305
        %v321 = vpack.c.b16 %v308, %v307
        %v322 = vpack.c.b16 %v310, %v309
        %v323 = vpack.c.b16 %v312, %v311
        %v324 = vpack.c.b16 %v314, %v313
        %v325 = vpack.c.b16 %v316, %v315
        %v326 = vpack.c.b16 %v318, %v317
        %335 = vmatpush.bf16.msra.mxu0 %v326
        %336 = vmatpush.bf16.msra.mxu0 %v325
        %337 = vmatpush.bf16.msra.mxu0 %v324
        %338 = vmatpush.bf16.msra.mxu0 %v323
        %339 = vmatpush.bf16.msra.mxu0 %v322
        %340 = vmatpush.bf16.msra.mxu0 %v321
        %341 = vmatpush.bf16.msra.mxu0 %v320
        %342 = vmatpush.bf16.msra.mxu0 %v319
        %343 = vmatmul.bf16.gmra.mxu0 %v266
        %v344 = vpop.f32.mrf.mxu0
        %v345 = vadd.f32 %v285, %v344
        %v346 = vpop.f32.mrf.mxu0
        %v347 = vadd.f32 %v285, %v346
        %348 = vdwg.mxu0
        %349 = vmax.xlane.f32.xlu0 %v345
        %v350 = vpop.xlane.xlu0 %349
        %351 = vmax.xlane.f32.xlu0 %v347
        %v352 = vpop.xlane.xlu0 %351
        %v353 = vsub.f32 %v345, %v350
        %v354 = vsub.f32 %v347, %v352
        %v355 = vmul.f32 %v353, 1.442695
        %v356 = vpow.pop %v355
        %v357 = vmul.f32 %v354, 1.442695
        %v358 = vpow.pop %v357
        %v359 = vld [vmem:[%s3] sm:$0x1]
        %v360 = vsub.f32 1.0, %v359
        %v362 = vperm.slane %v360, 0
        %v364 = vmul.f32 %v362, %v356
        %v365 = vmul.f32 %v362, %v358
        %366 = vadd.xlane.f32.xlu0 %v364
        %v367 = vpop.xlane.xlu0 %366
        %368 = vadd.xlane.f32.xlu0 %v365
        %v369 = vpop.xlane.xlu0 %368
        %v370 = vld [vmem:[%s262] sm:$0xff]
        %v371 = vld [vmem:[%s262 + $0x8] sm:$0xff]
        %vm372 = vcmp.gt.s32.totalorder %v370, 0
        %vm373 = vcmp.gt.s32.totalorder %v371, 0
        %v374 = vlaneseq
        %v375 = vand.u32 %v374, 127
        %376 = vset.pattern.permute.xlu0 0
        %377 = vperm.xlu0 %376, %v370
        %v378 = vpop.permute.xlu0 %377
        %379 = vset.pattern.permute.xlu0 0
        %380 = vperm.xlu0 %379, %v371
        %v381 = vpop.permute.xlu0 %380
        %vm382 = vcmp.eq.s32.totalorder %v375, %v378
        %vm383 = vcmp.eq.s32.totalorder %v375, %v381
        %384 = vset.pattern.permute.xlu0 1
        %385 = vperm.xlu0 %384, %v370
        %v386 = vpop.permute.xlu0 %385
        %387 = vset.pattern.permute.xlu0 1
        %388 = vperm.xlu0 %387, %v371
        %v389 = vpop.permute.xlu0 %388
        %vm390 = vcmp.eq.s32.totalorder %v375, %v386
        %vm391 = vcmp.eq.s32.totalorder %v375, %v389
        %v392 = vsel %vm382, %v345, 0.0
        %v393 = vsel %vm383, %v347, 0.0
        %394 = vadd.xlane.f32.xlu0 %v392
        %v395 = vpop.xlane.xlu0 %394
        %396 = vadd.xlane.f32.xlu0 %v393
        %v397 = vpop.xlane.xlu0 %396
        %v398 = vsub.f32 %v395, %v350
        %v399 = vsub.f32 %v397, %v352
        %v400 = vsel %vm390, %v345, 0.0
        %v401 = vsel %vm391, %v347, 0.0
        %402 = vadd.xlane.f32.xlu0 %v400
        %v403 = vpop.xlane.xlu0 %402
        %404 = vadd.xlane.f32.xlu0 %v401
        %v405 = vpop.xlane.xlu0 %404
        %v406 = vsub.f32 %v403, %v350
        %v407 = vsub.f32 %v405, %v352
        %v409 = vperm.slane %v359, 0
        %v411 = vsel %vm382, %v409, 0.0
        %v412 = vsel %vm383, %v409, 0.0
        %413 = vadd.xlane.f32.xlu0 %v411
        %v414 = vpop.xlane.xlu0 %413
        %415 = vadd.xlane.f32.xlu0 %v412
        %v416 = vpop.xlane.xlu0 %415
        %v417 = vsel %vm390, %v409, 0.0
        %v418 = vsel %vm391, %v409, 0.0
        %419 = vadd.xlane.f32.xlu0 %v417
        %v420 = vpop.xlane.xlu0 %419
        %421 = vadd.xlane.f32.xlu0 %v418
        %v422 = vpop.xlane.xlu0 %421
        %v423 = vmul.f32 %v398, 1.442695
        %v424 = vpow.pop %v423
        %v425 = vmul.f32 %v399, 1.442695
        %v426 = vpow.pop %v425
        %v427 = vmul.f32 %v414, %v424
        %v428 = vmul.f32 %v416, %v426
        %v429 = vadd.f32 %v367, %v427
        %v430 = vadd.f32 %v369, %v428
        %v431 = vmax.f32 %v429, 1e-30
        %v432 = vmax.f32 %v430, 1e-30
        %v433 = vmul.f32 %v406, 1.442695
        %v434 = vpow.pop %v433
        %v435 = vmul.f32 %v407, 1.442695
        %v436 = vpow.pop %v435
        %v437 = vmul.f32 %v420, %v434
        %v438 = vmul.f32 %v422, %v436
        %v439 = vadd.f32 %v367, %v437
        %v440 = vadd.f32 %v369, %v438
        %v441 = vmax.f32 %v439, 1e-30
        %v442 = vmax.f32 %v440, 1e-30
        %v443 = vlog2.pop %v431
        %v444 = vmul.f32 %v443, 0.6931472
        %v445 = vlog2.pop %v432
        %v446 = vmul.f32 %v445, 0.6931472
        %v447 = vsub.f32 %v398, %v444
        %v448 = vsub.f32 %v399, %v446
        %v449 = vlog2.pop %v441
        %v450 = vmul.f32 %v449, 0.6931472
        %v451 = vlog2.pop %v442
        %v452 = vmul.f32 %v451, 0.6931472
        %v453 = vsub.f32 %v406, %v450
        %v454 = vsub.f32 %v407, %v452
        %v455 = vsel %vm372, %v447, 0.0
        %v456 = vsel %vm373, %v448, 0.0
        %459 = vrot.lane.b32.xlu0 %v455, 126
        %v460 = vpop.permute.xlu0 %459
        %461 = vrot.lane.b32.xlu0 %v456, 126
        %v462 = vpop.permute.xlu0 %461
        %vm465 = vcmask 7168
        %v466 = vsel %vm465, %v460, 0.0
        %v467 = vsel %vm465, %v462, 0.0
        %v468 = vadd.f32 %v466, %v467
        %469 = vadd.xlane.f32.xlu0 %v468
        %v470 = vpop.xlane.xlu0 %469
        %v471 = vrot.slane %v470, 4
        %v472 = vadd.f32 %v470, %v471
        %v473 = vrot.slane %v472, 2
        %v474 = vadd.f32 %v472, %v473
        %v475 = vrot.slane %v474, 1
        %v476 = vadd.f32 %v474, %v475
        %s477 = vtos %v476
        %v478 = vsel %vm372, %v453, 0.0
        %v479 = vsel %vm373, %v454, 0.0
        %482 = vrot.lane.b32.xlu0 %v478, 126
        %v483 = vpop.permute.xlu0 %482
        %484 = vrot.lane.b32.xlu0 %v479, 126
        %v485 = vpop.permute.xlu0 %484
        %v488 = vsel %vm465, %v483, 0.0
        %v489 = vsel %vm465, %v485, 0.0
        %v490 = vadd.f32 %v488, %v489
        %491 = vadd.xlane.f32.xlu0 %v490
        %v492 = vpop.xlane.xlu0 %491
        %v493 = vrot.slane %v492, 4
        %v494 = vadd.f32 %v492, %v493
        %v495 = vrot.slane %v494, 2
        %v496 = vadd.f32 %v494, %v495
        %v497 = vrot.slane %v496, 1
        %v498 = vadd.f32 %v496, %v497
        %s499 = vtos %v498
        %vm500 = vcmp.eq.s32.totalorder %v375, 0
        %vm501 = vcmp.eq.s32.totalorder %v375, 1
        %v502 = vstv %s499
        %v503 = vsel %vm501, %v502, 0.0
        %v504 = vstv %s477
        %v505 = vsel %vm500, %v504, %v503
        %506 = vst [vmem:[%s251] sm:$0xff] %v505
        %s507 = sand.u32 %s143, 1
        %s508 = scalar_lea.sflag [#allocation4], %s507
        %s509 = sand.u32 %s143, 1
        %s510 = smul.addr %s509, 8
        %s511 = scalar_lea.vmem [#allocation5], %s510
        // Predicated region
        $region45: #{tpu_custom_call.1} parent=39 // pred_check
          %p512 = pneg %p153
        $region46: #{tpu_custom_call.1} parent=39 // pred_check_branch
          %514 = sbr.rel (%p512) target = $region48
        $region47: #{tpu_custom_call.1} parent=39 // pred_region
          %516 = vsyncadd %s508, 0
          %s517 = smul.addr %s20, 8
          %s518 = scalar_lea.hbm %s5, %s517
          %s520 = sshll.u32 %s511, 4
          %s521 = int_to_ptr.vmem [resolvable:$true] %s520
          %s522 = sshll.u32 %s518, 4
          %s523 = int_to_ptr.hbm [resolvable:$true] %s522
          %525 = dma.vmem_to_hbm [thread:$0]  %s521, 128, %s523, %s508
        $region48: #{tpu_custom_call.1} parent=39 // pred_fallthru
          _
      $region40: #{tpu_custom_call.1} parent=5 // pred_fallthru
        _
      %p526 = scmp.le.s32.totalorder 2, %s15
      // Predicated region
      $region49: #{tpu_custom_call.1} parent=5 // pred_check
        %p527 = pneg %p526
      $region50: #{tpu_custom_call.1} parent=5 // pred_check_branch
        %529 = sbr.rel (%p527) target = $region52
      $region51: #{tpu_custom_call.1} parent=5 // pred_region
        %s530 = ssub.s32 %s15, 2
        // Predicated region
        $region53: #{tpu_custom_call.1} parent=51 // pred_check
          %p531 = pneg %p159
        $region54: #{tpu_custom_call.1} parent=51 // pred_check_branch
          %533 = sbr.rel (%p531) target = $region56
        $region55: #{tpu_custom_call.1} parent=51 // pred_region
          %s534 = sand.u32 %s144, 1
          %s535 = scalar_lea.sflag [#allocation4], %s534
          %s536 = sand.u32 %s144, 1
          %s537 = smul.addr %s536, 8
          %s538 = scalar_lea.vmem [#allocation5], %s537
          %540 = dma.done %s535, 128
        $region56: #{tpu_custom_call.1} parent=51 // pred_fallthru
          _
      $region52: #{tpu_custom_call.1} parent=5 // pred_fallthru
        _
    $region6: #{tpu_custom_call.1} parent=1 // loop_footer
      %s19 = sadd.s32 1, %s15
    $region7: #{tpu_custom_call.1} parent=1 // loop_footer_branch
      %14 = sbr.rel target = $region3
    $region8: #{tpu_custom_call.1} parent=1 // loop_exit
      _
    %541 = vsyncpa [#allocation3], 1
    %s542 = scalar_lea.sflag [#allocation3], 1
    %543 = vsyncpa %s542, 1
    %544 = vsyncpa [#allocation4], 1
    %s545 = scalar_lea.sflag [#allocation4], 1
    %546 = vsyncpa %s545, 1

</llo_original>
